<compile_context>
chip_gen: v7x
topology: tpu7x:2x2x1
jax: 0.10.0
libtpu: 0.0.40
codegen_flags: <defaults>
</compile_context>

<pallas_src>
import math

import jax
import jax.numpy as jnp
from jax.experimental import pallas as pl
from jax.experimental.pallas import tpu as pltpu

# ---- small, deterministic hyperparameters (consistent with the module) ----
d_model = 32
d_k = 8
d_v = 8
n_heads = 4
seq_len = 8
batch = 2

NEG_INF = -1.0e9
LN_EPS = 1.0e-5

# MXU operand dtype.  f32 at these toy dims (kernel is pallas_call-overhead bound
# here anyway); set to jnp.bfloat16 on v6e/v7x at real BERT dims for ~2x MXU
# throughput (keep f32 accumulation / softmax / LayerNorm, loosen tolerances).
MXU_DTYPE = jnp.float32

HQ = n_heads * d_k          # 32  (all-heads Q columns)
HV = n_heads * d_v          # 32  (all-heads V columns)
QKV_COLS = 2 * HQ + HV      # 96


def mha_kernel(x_ref, mask_ref, wqkv_ref, bqkv_ref, wo_ref, bo_ref,
               gamma_ref, beta_ref, out_ref, attn_ref):
    """One grid step == one batch element (grid=(B,), 'parallel').

    x_ref    : [S, 3*d_model]   concat(Q, K, V) along features for this batch element
    mask_ref : [S, S] int32     nonzero == masked
    wqkv_ref : [3*d_model, 2*H*d_k + H*d_v]  block-diag over Q/K/V,
                                             columns [Q-heads | K-heads | V-heads]
    bqkv_ref : [1, 2*H*d_k + H*d_v]
    wo_ref   : [H*d_v, d_model]
    bo_ref / gamma_ref / beta_ref : [1, d_model]
    out_ref  : [S, d_model]
    attn_ref : [H, S, S]        written directly into the [B, H, S, S] output
    """
    x = x_ref[...]                                     # [S, 3*d_model]
    residual = x[:, :d_model]                          # Q slice is the residual

    # --- fused QKV projection: ONE lane-dense 2-D MXU matmul for all heads ----
    qkv = jnp.dot(x.astype(MXU_DTYPE), wqkv_ref[...].astype(MXU_DTYPE),
                  preferred_element_type=jnp.float32) + bqkv_ref[...]   # [S, 96]

    mask = mask_ref[...] != 0                          # [S, S] bool
    scale = 1.0 / math.sqrt(d_k)

    # --- per-head attention (H tiny & static -> unrolled; 2-D MXU ops only) ---
    ctx_heads = []
    for h in range(n_heads):
        qh = qkv[:, h * d_k:(h + 1) * d_k]                      # [S, d_k]
        kh = qkv[:, HQ + h * d_k:HQ + (h + 1) * d_k]            # [S, d_k]
        vh = qkv[:, 2 * HQ + h * d_v:2 * HQ + (h + 1) * d_v]    # [S, d_v]

        # q @ k^T without materializing k^T (contract the shared minor dim)
        s = jax.lax.dot_general(
            qh.astype(MXU_DTYPE), kh.astype(MXU_DTYPE),
            dimension_numbers=(((1,), (1,)), ((), ())),
            preferred_element_type=jnp.float32) * scale          # [S, S]
        s = jnp.where(mask, NEG_INF, s)

        m = jnp.max(s, axis=-1, keepdims=True)                   # stable softmax
        e = jnp.exp(s - m)
        denom = jnp.sum(e, axis=-1, keepdims=True)
        attn_h = e * pl.reciprocal(denom, approx=True)           # EUP slot, off the VALU
        attn_ref[h] = attn_h

        ctx_heads.append(jnp.dot(attn_h.astype(MXU_DTYPE), vh.astype(MXU_DTYPE),
                                 preferred_element_type=jnp.float32))  # [S, d_v]

    # --- fused output projection: one contraction over the full H*d_v axis ----
    ctx = jnp.concatenate(ctx_heads, axis=-1)                     # [S, H*d_v]
    y = jnp.dot(ctx.astype(MXU_DTYPE), wo_ref[...].astype(MXU_DTYPE),
                preferred_element_type=jnp.float32) + bo_ref[...] + residual

    # --- LayerNorm -------------------------------------------------------------
    mean = jnp.mean(y, axis=-1, keepdims=True)
    var = jnp.mean((y - mean) ** 2, axis=-1, keepdims=True)
    normed = (y - mean) * jax.lax.rsqrt(var + LN_EPS)
    out_ref[...] = normed * gamma_ref[...] + beta_ref[...]


def _pack_params(params):
    """Wrapper-side (plain XLA, one-time) repacking of the Linear weights.

    Columns grouped [all-heads-Q | all-heads-K | all-heads-V]; rows block-diagonal
    over the (Q | K | V) feature slices of x_cat.
    """
    w_qkv = jnp.zeros((3 * d_model, QKV_COLS), jnp.float32)
    w_qkv = w_qkv.at[:d_model, :HQ].set(params["wq"])
    w_qkv = w_qkv.at[d_model:2 * d_model, HQ:2 * HQ].set(params["wk"])
    w_qkv = w_qkv.at[2 * d_model:, 2 * HQ:].set(params["wv"])
    b_qkv = jnp.concatenate([params["bq"], params["bk"], params["bv"]], axis=-1)
    return w_qkv, b_qkv


def multi_head_attention(Q, K, V, attn_mask, params):
    """Q, K, V: [B, S, d_model] float32; attn_mask: [B, S, S] bool (True = masked)."""
    B, S, _ = Q.shape

    x_cat = jnp.concatenate([Q, K, V], axis=-1)          # [B, S, 3*d_model]
    mask_i = attn_mask.astype(jnp.int32)                 # compact [B, S, S] mask
    w_qkv, b_qkv = _pack_params(params)

    def full(shape):
        return pl.BlockSpec(shape, lambda b: (0,) * len(shape))

    out, attn = pl.pallas_call(
        mha_kernel,
        grid=(B,),
        out_shape=(jax.ShapeDtypeStruct((B, S, d_model), jnp.float32),
                   jax.ShapeDtypeStruct((B, n_heads, S, S), jnp.float32)),
        in_specs=[
            pl.BlockSpec((None, S, 3 * d_model), lambda b: (b, 0, 0)),   # x_cat
            pl.BlockSpec((None, S, S), lambda b: (b, 0, 0)),             # mask
            full((3 * d_model, QKV_COLS)),                               # w_qkv
            full((1, QKV_COLS)),                                         # b_qkv
            full((n_heads * d_v, d_model)),                              # wo
            full((1, d_model)),                                          # bo
            full((1, d_model)),                                          # gamma
            full((1, d_model)),                                          # beta
        ],
        out_specs=(
            pl.BlockSpec((None, S, d_model), lambda b: (b, 0, 0)),
            pl.BlockSpec((None, n_heads, S, S), lambda b: (b, 0, 0, 0)),
        ),
        compiler_params=pltpu.CompilerParams(
            dimension_semantics=("parallel",)),
    )(x_cat, mask_i, w_qkv, b_qkv, params["wo"], params["bo"],
      params["gamma"], params["beta"])
    return out, attn


def reference(Q, K, V, attn_mask, params):
    """Pure-JAX reference matching the PyTorch forward semantics."""
    B, S, _ = Q.shape
    q = (Q @ params["wq"] + params["bq"]).reshape(B, S, n_heads, d_k).transpose(0, 2, 1, 3)
    k = (K @ params["wk"] + params["bk"]).reshape(B, S, n_heads, d_k).transpose(0, 2, 1, 3)
    v = (V @ params["wv"] + params["bv"]).reshape(B, S, n_heads, d_v).transpose(0, 2, 1, 3)
    mask = attn_mask[:, None, :, :]                          # [B, 1, S, S] -> broadcast H
    scores = jnp.einsum("bhqd,bhkd->bhqk", q, k) / math.sqrt(d_k)
    scores = jnp.where(mask, NEG_INF, scores)
    attn = jax.nn.softmax(scores, axis=-1)
    ctx = jnp.einsum("bhqk,bhkd->bhqd", attn, v)
    ctx = ctx.transpose(0, 2, 1, 3).reshape(B, S, n_heads * d_v)
    out = ctx @ params["wo"] + params["bo"]
    x = out + Q
    mean = jnp.mean(x, axis=-1, keepdims=True)
    var = jnp.mean((x - mean) ** 2, axis=-1, keepdims=True)
    y = (x - mean) / jnp.sqrt(var + LN_EPS)
    return y * params["gamma"] + params["beta"], attn


def init_params(key):
    """Deterministic parameter init (PyTorch-style uniform ±1/sqrt(fan_in))."""
    ks = jax.random.split(key, 8)

    def lin(kw, kb, fan_in, fan_out):
        bound = 1.0 / math.sqrt(fan_in)
        w = jax.random.uniform(kw, (fan_in, fan_out), jnp.float32, -bound, bound)
        b = jax.random.uniform(kb, (1, fan_out), jnp.float32, -bound, bound)
        return w, b

    wq, bq = lin(ks[0], ks[1], d_model, n_heads * d_k)
    wk, bk = lin(ks[2], ks[3], d_model, n_heads * d_k)
    wv, bv = lin(ks[4], ks[5], d_model, n_heads * d_v)
    wo, bo = lin(ks[6], ks[7], n_heads * d_v, d_model)
    # fresh nn.LayerNorm in forward -> weight=1, bias=0
    gamma = jnp.ones((1, d_model), jnp.float32)
    beta = jnp.zeros((1, d_model), jnp.float32)
    return dict(wq=wq, bq=bq, wk=wk, bk=bk, wv=wv, bv=bv,
                wo=wo, bo=bo, gamma=gamma, beta=beta)


if __name__ == "__main__":
    key = jax.random.PRNGKey(0)
    k_p, k_q, k_k, k_v = jax.random.split(key, 4)

    params = init_params(k_p)
    Q = jax.random.normal(k_q, (batch, seq_len, d_model), jnp.float32)
    K = jax.random.normal(k_k, (batch, seq_len, d_model), jnp.float32)
    V = jax.random.normal(k_v, (batch, seq_len, d_model), jnp.float32)
    # padding-style mask: mask out the last two key positions of every row
    attn_mask = jnp.zeros((batch, seq_len, seq_len), jnp.bool_)
    attn_mask = attn_mask.at[:, :, -2:].set(True)

    out, attn = multi_head_attention(Q, K, V, attn_mask, params)
    out = jax.block_until_ready(out)
    attn = jax.block_until_ready(attn)

    out_ref, attn_ref = reference(Q, K, V, attn_mask, params)
    assert out.shape == (batch, seq_len, d_model)
    assert attn.shape == (batch, n_heads, seq_len, seq_len)
    # tolerance loosened vs v2 (1e-4 -> 2e-3) for pl.reciprocal(approx=True)
    assert jnp.allclose(out, out_ref, atol=2e-3, rtol=2e-3)
    assert jnp.allclose(attn, attn_ref, atol=2e-3, rtol=2e-3)

    print("KERNEL_OK")
</pallas_src>

<mosaic_0001>
module attributes {stable_mosaic.version = 11 : i64} {
  func.func @mha_kernel(%arg0: i32, %arg1: memref<1x8x96xf32, #tpu.memory_space<vmem>>, %arg2: memref<1x8x8xi32, #tpu.memory_space<vmem>>, %arg3: memref<96x96xf32, #tpu.memory_space<vmem>>, %arg4: memref<1x96xf32, #tpu.memory_space<vmem>>, %arg5: memref<32x32xf32, #tpu.memory_space<vmem>>, %arg6: memref<1x32xf32, #tpu.memory_space<vmem>>, %arg7: memref<1x32xf32, #tpu.memory_space<vmem>>, %arg8: memref<1x32xf32, #tpu.memory_space<vmem>>, %arg9: memref<1x8x32xf32, #tpu.memory_space<vmem>>, %arg10: memref<1x4x8x8xf32, #tpu.memory_space<vmem>>) attributes {dimension_semantics = [#tpu.dimension_semantics<parallel>], iteration_bounds = array<i64: 2>, scalar_prefetch = 0 : i64, scratch_operands = 0 : i64, tpu.core_type = #tpu.core_type<tc>, window_params = [{transform_indices = @transform_0, window_bounds = array<i64: 1, 8, 96>}, {transform_indices = @transform_1, window_bounds = array<i64: 1, 8, 8>}, {pipeline_mode = #tpu.pipeline_mode<synchronous>, transform_indices = @transform_2, window_bounds = array<i64: 96, 96>}, {pipeline_mode = #tpu.pipeline_mode<synchronous>, transform_indices = @transform_3, window_bounds = array<i64: 1, 96>}, {pipeline_mode = #tpu.pipeline_mode<synchronous>, transform_indices = @transform_4, window_bounds = array<i64: 32, 32>}, {pipeline_mode = #tpu.pipeline_mode<synchronous>, transform_indices = @transform_5, window_bounds = array<i64: 1, 32>}, {pipeline_mode = #tpu.pipeline_mode<synchronous>, transform_indices = @transform_6, window_bounds = array<i64: 1, 32>}, {pipeline_mode = #tpu.pipeline_mode<synchronous>, transform_indices = @transform_7, window_bounds = array<i64: 1, 32>}, {transform_indices = @transform_8, window_bounds = array<i64: 1, 8, 32>}, {transform_indices = @transform_9, window_bounds = array<i64: 1, 4, 8, 8>}]} {
    %c0 = arith.constant 0 : index
    %c0_0 = arith.constant 0 : index
    %c0_1 = arith.constant 0 : index
    %0 = vector.load %arg1[%c0, %c0_0, %c0_1] : memref<1x8x96xf32, #tpu.memory_space<vmem>>, vector<1x8x96xf32>
    %1 = vector.shape_cast %0 : vector<1x8x96xf32> to vector<8x96xf32>
    %2 = vector.extract_strided_slice %1 {offsets = [0, 0], sizes = [8, 32], strides = [1, 1]} : vector<8x96xf32> to vector<8x32xf32>
    %c0_2 = arith.constant 0 : index
    %c0_3 = arith.constant 0 : index
    %3 = vector.load %arg3[%c0_2, %c0_3] : memref<96x96xf32, #tpu.memory_space<vmem>>, vector<96x96xf32>
    %cst = arith.constant dense<0.000000e+00> : vector<8x96xf32>
    %4 = tpu.matmul %1, %3, %cst {dimension_numbers = #tpu.dot_dimension_numbers<[1], [0], [0], [1], [0, 0, 1, 1], [], []>} : vector<8x96xf32>, vector<96x96xf32>, vector<8x96xf32> -> vector<8x96xf32>
    %c0_4 = arith.constant 0 : index
    %c0_5 = arith.constant 0 : index
    %5 = vector.load %arg4[%c0_4, %c0_5] : memref<1x96xf32, #tpu.memory_space<vmem>>, vector<1x96xf32>
    %6 = vector.broadcast %5 : vector<1x96xf32> to vector<8x96xf32>
    %7 = arith.addf %4, %6 : vector<8x96xf32>
    %c0_6 = arith.constant 0 : index
    %c0_7 = arith.constant 0 : index
    %c0_8 = arith.constant 0 : index
    %8 = vector.load %arg2[%c0_6, %c0_7, %c0_8] : memref<1x8x8xi32, #tpu.memory_space<vmem>>, vector<1x8x8xi32>
    %9 = vector.shape_cast %8 : vector<1x8x8xi32> to vector<8x8xi32>
    %c0_i32 = arith.constant 0 : i32
    %10 = vector.broadcast %c0_i32 : i32 to vector<8x8xi32>
    %11 = arith.cmpi ne, %9, %10 : vector<8x8xi32>
    %12 = vector.extract_strided_slice %7 {offsets = [0, 0], sizes = [8, 8], strides = [1, 1]} : vector<8x96xf32> to vector<8x8xf32>
    %13 = vector.extract_strided_slice %7 {offsets = [0, 32], sizes = [8, 8], strides = [1, 1]} : vector<8x96xf32> to vector<8x8xf32>
    %14 = vector.extract_strided_slice %7 {offsets = [0, 64], sizes = [8, 8], strides = [1, 1]} : vector<8x96xf32> to vector<8x8xf32>
    %cst_9 = arith.constant dense<0.000000e+00> : vector<8x8xf32>
    %15 = tpu.matmul %12, %13, %cst_9 {dimension_numbers = #tpu.dot_dimension_numbers<[1], [1], [0], [0], [0, 0, 1, 0], [], []>} : vector<8x8xf32>, vector<8x8xf32>, vector<8x8xf32> -> vector<8x8xf32>
    %cst_10 = arith.constant 0.353553385 : f32
    %16 = vector.broadcast %cst_10 : f32 to vector<8x8xf32>
    %17 = arith.mulf %15, %16 : vector<8x8xf32>
    %cst_11 = arith.constant -1.000000e+09 : f32
    %18 = vector.broadcast %cst_11 : f32 to vector<8x8xf32>
    %19 = arith.select %11, %18, %17 : vector<8x8xi1>, vector<8x8xf32>
    %cst_12 = arith.constant dense<0xFF800000> : vector<8xf32>
    %20 = vector.multi_reduction <maximumf>, %19, %cst_12 [1] : vector<8x8xf32> to vector<8xf32>
    %21 = vector.shape_cast %20 : vector<8xf32> to vector<8x1xf32>
    %22 = vector.broadcast %21 : vector<8x1xf32> to vector<8x8xf32>
    %23 = arith.subf %19, %22 : vector<8x8xf32>
    %24 = math.exp %23 : vector<8x8xf32>
    %cst_13 = arith.constant dense<0.000000e+00> : vector<8xf32>
    %25 = vector.multi_reduction <add>, %24, %cst_13 [1] : vector<8x8xf32> to vector<8xf32>
    %26 = vector.shape_cast %25 : vector<8xf32> to vector<8x1xf32>
    %27 = tpu.reciprocal %26 {approx = true} : vector<8x1xf32> -> vector<8x1xf32>
    %28 = vector.broadcast %27 : vector<8x1xf32> to vector<8x8xf32>
    %29 = arith.mulf %24, %28 : vector<8x8xf32>
    %c0_14 = arith.constant 0 : index
    %c0_15 = arith.constant 0 : index
    %c0_16 = arith.constant 0 : index
    %c0_17 = arith.constant 0 : index
    %30 = vector.load %arg10[%c0_14, %c0_15, %c0_16, %c0_17] : memref<1x4x8x8xf32, #tpu.memory_space<vmem>>, vector<1x1x8x8xf32>
    %31 = vector.shape_cast %30 : vector<1x1x8x8xf32> to vector<8x8xf32>
    %32 = vector.shape_cast %29 : vector<8x8xf32> to vector<1x1x8x8xf32>
    tpu.vector_store %arg10[%c0_14, %c0_15, %c0_16, %c0_17], %32 {strides = array<i32>} : memref<1x4x8x8xf32, #tpu.memory_space<vmem>>, vector<1x1x8x8xf32>,
    %cst_18 = arith.constant dense<0.000000e+00> : vector<8x8xf32>
    %33 = tpu.matmul %29, %14, %cst_18 {dimension_numbers = #tpu.dot_dimension_numbers<[1], [0], [0], [1], [0, 0, 1, 1], [], []>} : vector<8x8xf32>, vector<8x8xf32>, vector<8x8xf32> -> vector<8x8xf32>
    %34 = vector.extract_strided_slice %7 {offsets = [0, 8], sizes = [8, 8], strides = [1, 1]} : vector<8x96xf32> to vector<8x8xf32>
    %35 = vector.extract_strided_slice %7 {offsets = [0, 40], sizes = [8, 8], strides = [1, 1]} : vector<8x96xf32> to vector<8x8xf32>
    %36 = vector.extract_strided_slice %7 {offsets = [0, 72], sizes = [8, 8], strides = [1, 1]} : vector<8x96xf32> to vector<8x8xf32>
    %cst_19 = arith.constant dense<0.000000e+00> : vector<8x8xf32>
    %37 = tpu.matmul %34, %35, %cst_19 {dimension_numbers = #tpu.dot_dimension_numbers<[1], [1], [0], [0], [0, 0, 1, 0], [], []>} : vector<8x8xf32>, vector<8x8xf32>, vector<8x8xf32> -> vector<8x8xf32>
    %cst_20 = arith.constant 0.353553385 : f32
    %38 = vector.broadcast %cst_20 : f32 to vector<8x8xf32>
    %39 = arith.mulf %37, %38 : vector<8x8xf32>
    %cst_21 = arith.constant -1.000000e+09 : f32
    %40 = vector.broadcast %cst_21 : f32 to vector<8x8xf32>
    %41 = arith.select %11, %40, %39 : vector<8x8xi1>, vector<8x8xf32>
    %cst_22 = arith.constant dense<0xFF800000> : vector<8xf32>
    %42 = vector.multi_reduction <maximumf>, %41, %cst_22 [1] : vector<8x8xf32> to vector<8xf32>
    %43 = vector.shape_cast %42 : vector<8xf32> to vector<8x1xf32>
    %44 = vector.broadcast %43 : vector<8x1xf32> to vector<8x8xf32>
    %45 = arith.subf %41, %44 : vector<8x8xf32>
    %46 = math.exp %45 : vector<8x8xf32>
    %cst_23 = arith.constant dense<0.000000e+00> : vector<8xf32>
    %47 = vector.multi_reduction <add>, %46, %cst_23 [1] : vector<8x8xf32> to vector<8xf32>
    %48 = vector.shape_cast %47 : vector<8xf32> to vector<8x1xf32>
    %49 = tpu.reciprocal %48 {approx = true} : vector<8x1xf32> -> vector<8x1xf32>
    %50 = vector.broadcast %49 : vector<8x1xf32> to vector<8x8xf32>
    %51 = arith.mulf %46, %50 : vector<8x8xf32>
    %c0_24 = arith.constant 0 : index
    %c1 = arith.constant 1 : index
    %c0_25 = arith.constant 0 : index
    %c0_26 = arith.constant 0 : index
    %52 = vector.load %arg10[%c0_24, %c1, %c0_25, %c0_26] : memref<1x4x8x8xf32, #tpu.memory_space<vmem>>, vector<1x1x8x8xf32>
    %53 = vector.shape_cast %52 : vector<1x1x8x8xf32> to vector<8x8xf32>
    %54 = vector.shape_cast %51 : vector<8x8xf32> to vector<1x1x8x8xf32>
    tpu.vector_store %arg10[%c0_24, %c1, %c0_25, %c0_26], %54 {strides = array<i32>} : memref<1x4x8x8xf32, #tpu.memory_space<vmem>>, vector<1x1x8x8xf32>,
    %cst_27 = arith.constant dense<0.000000e+00> : vector<8x8xf32>
    %55 = tpu.matmul %51, %36, %cst_27 {dimension_numbers = #tpu.dot_dimension_numbers<[1], [0], [0], [1], [0, 0, 1, 1], [], []>} : vector<8x8xf32>, vector<8x8xf32>, vector<8x8xf32> -> vector<8x8xf32>
    %56 = vector.extract_strided_slice %7 {offsets = [0, 16], sizes = [8, 8], strides = [1, 1]} : vector<8x96xf32> to vector<8x8xf32>
    %57 = vector.extract_strided_slice %7 {offsets = [0, 48], sizes = [8, 8], strides = [1, 1]} : vector<8x96xf32> to vector<8x8xf32>
    %58 = vector.extract_strided_slice %7 {offsets = [0, 80], sizes = [8, 8], strides = [1, 1]} : vector<8x96xf32> to vector<8x8xf32>
    %cst_28 = arith.constant dense<0.000000e+00> : vector<8x8xf32>
    %59 = tpu.matmul %56, %57, %cst_28 {dimension_numbers = #tpu.dot_dimension_numbers<[1], [1], [0], [0], [0, 0, 1, 0], [], []>} : vector<8x8xf32>, vector<8x8xf32>, vector<8x8xf32> -> vector<8x8xf32>
    %cst_29 = arith.constant 0.353553385 : f32
    %60 = vector.broadcast %cst_29 : f32 to vector<8x8xf32>
    %61 = arith.mulf %59, %60 : vector<8x8xf32>
    %cst_30 = arith.constant -1.000000e+09 : f32
    %62 = vector.broadcast %cst_30 : f32 to vector<8x8xf32>
    %63 = arith.select %11, %62, %61 : vector<8x8xi1>, vector<8x8xf32>
    %cst_31 = arith.constant dense<0xFF800000> : vector<8xf32>
    %64 = vector.multi_reduction <maximumf>, %63, %cst_31 [1] : vector<8x8xf32> to vector<8xf32>
    %65 = vector.shape_cast %64 : vector<8xf32> to vector<8x1xf32>
    %66 = vector.broadcast %65 : vector<8x1xf32> to vector<8x8xf32>
    %67 = arith.subf %63, %66 : vector<8x8xf32>
    %68 = math.exp %67 : vector<8x8xf32>
    %cst_32 = arith.constant dense<0.000000e+00> : vector<8xf32>
    %69 = vector.multi_reduction <add>, %68, %cst_32 [1] : vector<8x8xf32> to vector<8xf32>
    %70 = vector.shape_cast %69 : vector<8xf32> to vector<8x1xf32>
    %71 = tpu.reciprocal %70 {approx = true} : vector<8x1xf32> -> vector<8x1xf32>
    %72 = vector.broadcast %71 : vector<8x1xf32> to vector<8x8xf32>
    %73 = arith.mulf %68, %72 : vector<8x8xf32>
    %c0_33 = arith.constant 0 : index
    %c2 = arith.constant 2 : index
    %c0_34 = arith.constant 0 : index
    %c0_35 = arith.constant 0 : index
    %74 = vector.load %arg10[%c0_33, %c2, %c0_34, %c0_35] : memref<1x4x8x8xf32, #tpu.memory_space<vmem>>, vector<1x1x8x8xf32>
    %75 = vector.shape_cast %74 : vector<1x1x8x8xf32> to vector<8x8xf32>
    %76 = vector.shape_cast %73 : vector<8x8xf32> to vector<1x1x8x8xf32>
    tpu.vector_store %arg10[%c0_33, %c2, %c0_34, %c0_35], %76 {strides = array<i32>} : memref<1x4x8x8xf32, #tpu.memory_space<vmem>>, vector<1x1x8x8xf32>,
    %cst_36 = arith.constant dense<0.000000e+00> : vector<8x8xf32>
    %77 = tpu.matmul %73, %58, %cst_36 {dimension_numbers = #tpu.dot_dimension_numbers<[1], [0], [0], [1], [0, 0, 1, 1], [], []>} : vector<8x8xf32>, vector<8x8xf32>, vector<8x8xf32> -> vector<8x8xf32>
    %78 = vector.extract_strided_slice %7 {offsets = [0, 24], sizes = [8, 8], strides = [1, 1]} : vector<8x96xf32> to vector<8x8xf32>
    %79 = vector.extract_strided_slice %7 {offsets = [0, 56], sizes = [8, 8], strides = [1, 1]} : vector<8x96xf32> to vector<8x8xf32>
    %80 = vector.extract_strided_slice %7 {offsets = [0, 88], sizes = [8, 8], strides = [1, 1]} : vector<8x96xf32> to vector<8x8xf32>
    %cst_37 = arith.constant dense<0.000000e+00> : vector<8x8xf32>
    %81 = tpu.matmul %78, %79, %cst_37 {dimension_numbers = #tpu.dot_dimension_numbers<[1], [1], [0], [0], [0, 0, 1, 0], [], []>} : vector<8x8xf32>, vector<8x8xf32>, vector<8x8xf32> -> vector<8x8xf32>
    %cst_38 = arith.constant 0.353553385 : f32
    %82 = vector.broadcast %cst_38 : f32 to vector<8x8xf32>
    %83 = arith.mulf %81, %82 : vector<8x8xf32>
    %cst_39 = arith.constant -1.000000e+09 : f32
    %84 = vector.broadcast %cst_39 : f32 to vector<8x8xf32>
    %85 = arith.select %11, %84, %83 : vector<8x8xi1>, vector<8x8xf32>
    %cst_40 = arith.constant dense<0xFF800000> : vector<8xf32>
    %86 = vector.multi_reduction <maximumf>, %85, %cst_40 [1] : vector<8x8xf32> to vector<8xf32>
    %87 = vector.shape_cast %86 : vector<8xf32> to vector<8x1xf32>
    %88 = vector.broadcast %87 : vector<8x1xf32> to vector<8x8xf32>
    %89 = arith.subf %85, %88 : vector<8x8xf32>
    %90 = math.exp %89 : vector<8x8xf32>
    %cst_41 = arith.constant dense<0.000000e+00> : vector<8xf32>
    %91 = vector.multi_reduction <add>, %90, %cst_41 [1] : vector<8x8xf32> to vector<8xf32>
    %92 = vector.shape_cast %91 : vector<8xf32> to vector<8x1xf32>
    %93 = tpu.reciprocal %92 {approx = true} : vector<8x1xf32> -> vector<8x1xf32>
    %94 = vector.broadcast %93 : vector<8x1xf32> to vector<8x8xf32>
    %95 = arith.mulf %90, %94 : vector<8x8xf32>
    %c0_42 = arith.constant 0 : index
    %c3 = arith.constant 3 : index
    %c0_43 = arith.constant 0 : index
    %c0_44 = arith.constant 0 : index
    %96 = vector.load %arg10[%c0_42, %c3, %c0_43, %c0_44] : memref<1x4x8x8xf32, #tpu.memory_space<vmem>>, vector<1x1x8x8xf32>
    %97 = vector.shape_cast %96 : vector<1x1x8x8xf32> to vector<8x8xf32>
    %98 = vector.shape_cast %95 : vector<8x8xf32> to vector<1x1x8x8xf32>
    tpu.vector_store %arg10[%c0_42, %c3, %c0_43, %c0_44], %98 {strides = array<i32>} : memref<1x4x8x8xf32, #tpu.memory_space<vmem>>, vector<1x1x8x8xf32>,
    %cst_45 = arith.constant dense<0.000000e+00> : vector<8x8xf32>
    %99 = tpu.matmul %95, %80, %cst_45 {dimension_numbers = #tpu.dot_dimension_numbers<[1], [0], [0], [1], [0, 0, 1, 1], [], []>} : vector<8x8xf32>, vector<8x8xf32>, vector<8x8xf32> -> vector<8x8xf32>
    %100 = tpu.concatenate %33, %55, %77, %99 in 1 : vector<8x8xf32>, vector<8x8xf32>, vector<8x8xf32>, vector<8x8xf32> -> vector<8x32xf32>
    %c0_46 = arith.constant 0 : index
    %c0_47 = arith.constant 0 : index
    %101 = vector.load %arg5[%c0_46, %c0_47] : memref<32x32xf32, #tpu.memory_space<vmem>>, vector<32x32xf32>
    %cst_48 = arith.constant dense<0.000000e+00> : vector<8x32xf32>
    %102 = tpu.matmul %100, %101, %cst_48 {dimension_numbers = #tpu.dot_dimension_numbers<[1], [0], [0], [1], [0, 0, 1, 1], [], []>} : vector<8x32xf32>, vector<32x32xf32>, vector<8x32xf32> -> vector<8x32xf32>
    %c0_49 = arith.constant 0 : index
    %c0_50 = arith.constant 0 : index
    %103 = vector.load %arg6[%c0_49, %c0_50] : memref<1x32xf32, #tpu.memory_space<vmem>>, vector<1x32xf32>
    %104 = vector.broadcast %103 : vector<1x32xf32> to vector<8x32xf32>
    %105 = arith.addf %102, %104 : vector<8x32xf32>
    %106 = arith.addf %105, %2 : vector<8x32xf32>
    %cst_51 = arith.constant dense<0.000000e+00> : vector<8xf32>
    %107 = vector.multi_reduction <add>, %106, %cst_51 [1] : vector<8x32xf32> to vector<8xf32>
    %108 = vector.shape_cast %107 : vector<8xf32> to vector<8x1xf32>
    %cst_52 = arith.constant 3.200000e+01 : f32
    %109 = vector.broadcast %cst_52 : f32 to vector<8x1xf32>
    %110 = arith.divf %108, %109 : vector<8x1xf32>
    %111 = vector.broadcast %110 : vector<8x1xf32> to vector<8x32xf32>
    %112 = arith.subf %106, %111 : vector<8x32xf32>
    %113 = arith.mulf %112, %112 : vector<8x32xf32>
    %cst_53 = arith.constant dense<0.000000e+00> : vector<8xf32>
    %114 = vector.multi_reduction <add>, %113, %cst_53 [1] : vector<8x32xf32> to vector<8xf32>
    %115 = vector.shape_cast %114 : vector<8xf32> to vector<8x1xf32>
    %cst_54 = arith.constant 3.200000e+01 : f32
    %116 = vector.broadcast %cst_54 : f32 to vector<8x1xf32>
    %117 = arith.divf %115, %116 : vector<8x1xf32>
    %118 = vector.broadcast %110 : vector<8x1xf32> to vector<8x32xf32>
    %119 = arith.subf %106, %118 : vector<8x32xf32>
    %cst_55 = arith.constant 9.99999974E-6 : f32
    %120 = vector.broadcast %cst_55 : f32 to vector<8x1xf32>
    %121 = arith.addf %117, %120 : vector<8x1xf32>
    %122 = math.rsqrt %121 : vector<8x1xf32>
    %123 = vector.broadcast %122 : vector<8x1xf32> to vector<8x32xf32>
    %124 = arith.mulf %119, %123 : vector<8x32xf32>
    %c0_56 = arith.constant 0 : index
    %c0_57 = arith.constant 0 : index
    %125 = vector.load %arg7[%c0_56, %c0_57] : memref<1x32xf32, #tpu.memory_space<vmem>>, vector<1x32xf32>
    %126 = vector.broadcast %125 : vector<1x32xf32> to vector<8x32xf32>
    %127 = arith.mulf %124, %126 : vector<8x32xf32>
    %c0_58 = arith.constant 0 : index
    %c0_59 = arith.constant 0 : index
    %128 = vector.load %arg8[%c0_58, %c0_59] : memref<1x32xf32, #tpu.memory_space<vmem>>, vector<1x32xf32>
    %129 = vector.broadcast %128 : vector<1x32xf32> to vector<8x32xf32>
    %130 = arith.addf %127, %129 : vector<8x32xf32>
    %c0_60 = arith.constant 0 : index
    %c0_61 = arith.constant 0 : index
    %c0_62 = arith.constant 0 : index
    %131 = vector.load %arg9[%c0_60, %c0_61, %c0_62] : memref<1x8x32xf32, #tpu.memory_space<vmem>>, vector<1x8x32xf32>
    %132 = vector.shape_cast %131 : vector<1x8x32xf32> to vector<8x32xf32>
    %133 = vector.shape_cast %130 : vector<8x32xf32> to vector<1x8x32xf32>
    tpu.vector_store %arg9[%c0_60, %c0_61, %c0_62], %133 {strides = array<i32>} : memref<1x8x32xf32, #tpu.memory_space<vmem>>, vector<1x8x32xf32>,
    return
  }
  func.func @transform_0(%arg0: i32) -> (i32, i32, i32) {
    %c0_i32 = arith.constant 0 : i32
    %c0_i32_0 = arith.constant 0 : i32
    %c0_i32_1 = arith.constant 0 : i32
    return %arg0, %c0_i32, %c0_i32_0 : i32, i32, i32
  }
  func.func @transform_1(%arg0: i32) -> (i32, i32, i32) {
    %c0_i32 = arith.constant 0 : i32
    %c0_i32_0 = arith.constant 0 : i32
    %c0_i32_1 = arith.constant 0 : i32
    return %arg0, %c0_i32, %c0_i32_0 : i32, i32, i32
  }
  func.func @transform_2(%arg0: i32) -> (i32, i32) {
    %c0_i32 = arith.constant 0 : i32
    %c0_i32_0 = arith.constant 0 : i32
    %c0_i32_1 = arith.constant 0 : i32
    return %c0_i32, %c0_i32_0 : i32, i32
  }
  func.func @transform_3(%arg0: i32) -> (i32, i32) {
    %c0_i32 = arith.constant 0 : i32
    %c0_i32_0 = arith.constant 0 : i32
    %c0_i32_1 = arith.constant 0 : i32
    return %c0_i32, %c0_i32_0 : i32, i32
  }
  func.func @transform_4(%arg0: i32) -> (i32, i32) {
    %c0_i32 = arith.constant 0 : i32
    %c0_i32_0 = arith.constant 0 : i32
    %c0_i32_1 = arith.constant 0 : i32
    return %c0_i32, %c0_i32_0 : i32, i32
  }
  func.func @transform_5(%arg0: i32) -> (i32, i32) {
    %c0_i32 = arith.constant 0 : i32
    %c0_i32_0 = arith.constant 0 : i32
    %c0_i32_1 = arith.constant 0 : i32
    return %c0_i32, %c0_i32_0 : i32, i32
  }
  func.func @transform_6(%arg0: i32) -> (i32, i32) {
    %c0_i32 = arith.constant 0 : i32
    %c0_i32_0 = arith.constant 0 : i32
    %c0_i32_1 = arith.constant 0 : i32
    return %c0_i32, %c0_i32_0 : i32, i32
  }
  func.func @transform_7(%arg0: i32) -> (i32, i32) {
    %c0_i32 = arith.constant 0 : i32
    %c0_i32_0 = arith.constant 0 : i32
    %c0_i32_1 = arith.constant 0 : i32
    return %c0_i32, %c0_i32_0 : i32, i32
  }
  func.func @transform_8(%arg0: i32) -> (i32, i32, i32) {
    %c0_i32 = arith.constant 0 : i32
    %c0_i32_0 = arith.constant 0 : i32
    %c0_i32_1 = arith.constant 0 : i32
    return %arg0, %c0_i32, %c0_i32_0 : i32, i32, i32
  }
  func.func @transform_9(%arg0: i32) -> (i32, i32, i32, i32) {
    %c0_i32 = arith.constant 0 : i32
    %c0_i32_0 = arith.constant 0 : i32
    %c0_i32_1 = arith.constant 0 : i32
    %c0_i32_2 = arith.constant 0 : i32
    return %arg0, %c0_i32, %c0_i32_0, %c0_i32_1 : i32, i32, i32, i32
  }
}

</mosaic_0001>

<llo_original>
// kernel: tpu_custom_call.1
$region0: #{tpu_custom_call.1}
  #allocation0 [shape = 'u32[]', space=smem, size = 0x4, offset = 0x4, fixed_abs, tag = 'smem constant byte address 0x4 - core index']
  #allocation1 [shape = 'u32[144,128]{1,0:T(1,128)}', space=vmem, size = 0x12000, scoped, tag = 'internal scratch']
  %s0 = inlined_call_operand.hbm [shape: f32[2,8,96], index: 0, kind: input, shape index: {}]
  %s1 = inlined_call_operand.hbm [shape: s32[2,8,8], index: 1, kind: input, shape index: {}]
  %s2 = inlined_call_operand.hbm [shape: f32[96,96], index: 2, kind: input, shape index: {}]
  %s3 = inlined_call_operand.vmem [shape: f32[1,96], index: 3, kind: input, shape index: {}]
  %s4 = inlined_call_operand.hbm [shape: f32[32,32], index: 4, kind: input, shape index: {}]
  %s5 = inlined_call_operand.vmem [shape: f32[1,32], index: 5, kind: input, shape index: {}]
  %s6 = inlined_call_operand.vmem [shape: f32[1,32], index: 6, kind: input, shape index: {}]
  %s7 = inlined_call_operand.vmem [shape: f32[1,32], index: 7, kind: input, shape index: {}]
  %s8 = inlined_call_operand.hbm [shape: f32[2,8,32], index: 8, kind: output, shape index: {0}]
  %s9 = inlined_call_operand.hbm [shape: f32[2,4,8,8], index: 9, kind: output, shape index: {1}]
  %10 = xla_tuple %s8, %s9
  %s11 = sld [smem:[#allocation0]]
  $region89: #{tpu_custom_call.1} parent=0
    _
  %s13 = ssub.s32 1, %s11
  %s14 = scalar_select 0, %s13, %s11
  $region1: #{tpu_custom_call.1} parent=0
    #allocation2 [shape = 'u8[8192]{0}', space=vmem, size = 0x2000, scoped, tag = 'input window, operand 0']
    #allocation3 [shape = 's32[2]{0}', space=sflag, size = 0x8, scoped, tag = 'scoped memory for tpu_custom_call.1']
    #allocation4 [shape = 's32[2]{0}', space=sflag, size = 0x8, scoped, tag = 'scoped memory for tpu_custom_call.1']
    #allocation5 [shape = 'u8[8192]{0}', space=vmem, size = 0x2000, scoped, tag = 'input window, operand 1']
    #allocation6 [shape = 's32[2]{0}', space=sflag, size = 0x8, scoped, tag = 'scoped memory for tpu_custom_call.1']
    #allocation7 [shape = 'u8[49152]{0}', space=vmem, size = 0xc000, scoped, tag = 'input window, operand 2, single buffered']
    #allocation8 [shape = 'u8[16384]{0}', space=vmem, size = 0x4000, scoped, tag = 'input window, operand 4, single buffered']
    #allocation9 [shape = 's32[1]{0}', space=sflag, size = 0x4, scoped, tag = 'scoped memory for tpu_custom_call.1']
    #allocation10 [shape = 'u8[8192]{0}', space=vmem, size = 0x2000, scoped, tag = 'output window, operand 0']
    #allocation11 [shape = 'u8[32768]{0}', space=vmem, size = 0x8000, scoped, tag = 'output window, operand 1']
    #allocation12 [shape = 's32[2]{0}', space=sflag, size = 0x8, scoped, tag = 'scoped memory for tpu_custom_call.1']
    %15 = vsyncpa [#allocation3], 0
    %s16 = scalar_lea.sflag [#allocation3], 1
    %17 = vsyncpa %s16, 0
    %18 = vsyncpa [#allocation6], 0
    %s19 = scalar_lea.sflag [#allocation6], 1
    %20 = vsyncpa %s19, 0
    %21 = vsyncpa [#allocation9], 0
    %22 = vsyncpa [#allocation4], 0
    %s23 = scalar_lea.sflag [#allocation4], 1
    %24 = vsyncpa %s23, 0
    %25 = vsyncpa [#allocation12], 0
    %s26 = scalar_lea.sflag [#allocation12], 1
    %27 = vsyncpa %s26, 0
    loop: start=0, step=1, limit=4
    $region2: #{tpu_custom_call.1} parent=1 // loop_pre_header
      _
    $region3: #{tpu_custom_call.1} parent=1 // loop_header
      %s29 = sphi 0, %s33
      %p30 = scmp.ge.s32.totalorder %s29, 4
      %s39 = sphi 0, %s41
      %s42 = sphi 0, %s39
      %s43 = sphi 0, %s42
      %s59 = sphi 0, %s43
      %s65 = sphi 0, %s67
      %s68 = sphi 0, %s65
      %s69 = sphi 0, %s68
      %s85 = sphi 0, %s69
      %s89 = sphi 0, %s89
      %s91 = sphi 0, %s89
      %s92 = sphi 0, %s91
      %s106 = sphi 0, %s92
      %s110 = sphi 0, %s110
      %s112 = sphi 0, %s110
      %s113 = sphi 0, %s112
      %s127 = sphi 0, %s113
      %s131 = sphi 0, %s131
      %s133 = sphi 0, %s131
      %s134 = sphi 0, %s133
      %s148 = sphi 0, %s134
      %s152 = sphi 0, %s152
      %s154 = sphi 0, %s152
      %s155 = sphi 0, %s154
      %s169 = sphi 0, %s155
      %s173 = sphi 0, %s173
      %s175 = sphi 0, %s173
      %s176 = sphi 0, %s175
      %s190 = sphi 0, %s176
      %s194 = sphi 0, %s194
      %s196 = sphi 0, %s194
      %s197 = sphi 0, %s196
      %s211 = sphi 0, %s197
      %s217 = sphi 0, %s219
      %s220 = sphi 0, %s217
      %s221 = sphi 0, %s220
      %s237 = sphi 0, %s221
      %s243 = sphi 0, %s245
      %s246 = sphi 0, %s243
      %s247 = sphi 0, %s246
      %s263 = sphi 0, %s247
    $region4: #{tpu_custom_call.1} parent=1 // loop_header_branch
      %32 = sbr.rel (%p30) target = $region8
    $region5: #{tpu_custom_call.1} parent=1 // loop_body
      %s34 = ssub.s32 %s29, 1
      %s35 = ssub.s32 %s29, 2
      %s36 = sadd.s32 %s29, 1
      %s37 = ssub.s32 %s29, %s36
      %p38 = scmp.eq.s32.totalorder %s37, 0
      %s40 = sadd.s32 %s39, 1
      %s41 = scalar_select %p38, %s39, %s40
      %p44 = pneg %p38
      %p45 = scmp.eq.s32.totalorder %s29, 1
      %p46 = por %p44, %p45
      %p47 = scmp.ne.s32.totalorder %s39, %s42
      %p48 = scmp.eq.s32.totalorder %s29, 0
      %p49 = por %p47, %p48
      %p50 = scmp.ne.s32.totalorder %s39, %s42
      %p51 = scmp.eq.s32.totalorder %s34, 1
      %p52 = por %p50, %p51
      %p53 = scmp.ne.s32.totalorder %s42, %s43
      %p54 = scmp.eq.s32.totalorder %s34, 0
      %p55 = por %p53, %p54
      %p56 = scmp.ne.s32.totalorder %s42, %s43
      %p57 = scmp.eq.s32.totalorder %s35, 1
      %p58 = por %p56, %p57
      %p60 = scmp.ne.s32.totalorder %s43, %s59
      %p61 = scmp.eq.s32.totalorder %s35, 0
      %p62 = por %p60, %p61
      %s63 = ssub.s32 %s29, %s36
      %p64 = scmp.eq.s32.totalorder %s63, 0
      %s66 = sadd.s32 %s65, 1
      %s67 = scalar_select %p64, %s65, %s66
      %p70 = pneg %p64
      %p71 = scmp.eq.s32.totalorder %s29, 1
      %p72 = por %p70, %p71
      %p73 = scmp.ne.s32.totalorder %s65, %s68
      %p74 = scmp.eq.s32.totalorder %s29, 0
      %p75 = por %p73, %p74
      %p76 = scmp.ne.s32.totalorder %s65, %s68
      %p77 = scmp.eq.s32.totalorder %s34, 1
      %p78 = por %p76, %p77
      %p79 = scmp.ne.s32.totalorder %s68, %s69
      %p80 = scmp.eq.s32.totalorder %s34, 0
      %p81 = por %p79, %p80
      %p82 = scmp.ne.s32.totalorder %s68, %s69
      %p83 = scmp.eq.s32.totalorder %s35, 1
      %p84 = por %p82, %p83
      %p86 = scmp.ne.s32.totalorder %s69, %s85
      %p87 = scmp.eq.s32.totalorder %s35, 0
      %p88 = por %p86, %p87
      %s90 = sadd.s32 %s89, 1
      %p93 = scmp.eq.s32.totalorder %s29, 1
      %p94 = scmp.ne.s32.totalorder %s89, %s91
      %p95 = scmp.eq.s32.totalorder %s29, 0
      %p96 = por %p94, %p95
      %p97 = scmp.ne.s32.totalorder %s89, %s91
      %p98 = scmp.eq.s32.totalorder %s34, 1
      %p99 = por %p97, %p98
      %p100 = scmp.ne.s32.totalorder %s91, %s92
      %p101 = scmp.eq.s32.totalorder %s34, 0
      %p102 = por %p100, %p101
      %p103 = scmp.ne.s32.totalorder %s91, %s92
      %p104 = scmp.eq.s32.totalorder %s35, 1
      %p105 = por %p103, %p104
      %p107 = scmp.ne.s32.totalorder %s92, %s106
      %p108 = scmp.eq.s32.totalorder %s35, 0
      %p109 = por %p107, %p108
      %s111 = sadd.s32 %s110, 1
      %p114 = scmp.eq.s32.totalorder %s29, 1
      %p115 = scmp.ne.s32.totalorder %s110, %s112
      %p116 = scmp.eq.s32.totalorder %s29, 0
      %p117 = por %p115, %p116
      %p118 = scmp.ne.s32.totalorder %s110, %s112
      %p119 = scmp.eq.s32.totalorder %s34, 1
      %p120 = por %p118, %p119
      %p121 = scmp.ne.s32.totalorder %s112, %s113
      %p122 = scmp.eq.s32.totalorder %s34, 0
      %p123 = por %p121, %p122
      %p124 = scmp.ne.s32.totalorder %s112, %s113
      %p125 = scmp.eq.s32.totalorder %s35, 1
      %p126 = por %p124, %p125
      %p128 = scmp.ne.s32.totalorder %s113, %s127
      %p129 = scmp.eq.s32.totalorder %s35, 0
      %p130 = por %p128, %p129
      %s132 = sadd.s32 %s131, 1
      %p135 = scmp.eq.s32.totalorder %s29, 1
      %p136 = scmp.ne.s32.totalorder %s131, %s133
      %p137 = scmp.eq.s32.totalorder %s29, 0
      %p138 = por %p136, %p137
      %p139 = scmp.ne.s32.totalorder %s131, %s133
      %p140 = scmp.eq.s32.totalorder %s34, 1
      %p141 = por %p139, %p140
      %p142 = scmp.ne.s32.totalorder %s133, %s134
      %p143 = scmp.eq.s32.totalorder %s34, 0
      %p144 = por %p142, %p143
      %p145 = scmp.ne.s32.totalorder %s133, %s134
      %p146 = scmp.eq.s32.totalorder %s35, 1
      %p147 = por %p145, %p146
      %p149 = scmp.ne.s32.totalorder %s134, %s148
      %p150 = scmp.eq.s32.totalorder %s35, 0
      %p151 = por %p149, %p150
      %s153 = sadd.s32 %s152, 1
      %p156 = scmp.eq.s32.totalorder %s29, 1
      %p157 = scmp.ne.s32.totalorder %s152, %s154
      %p158 = scmp.eq.s32.totalorder %s29, 0
      %p159 = por %p157, %p158
      %p160 = scmp.ne.s32.totalorder %s152, %s154
      %p161 = scmp.eq.s32.totalorder %s34, 1
      %p162 = por %p160, %p161
      %p163 = scmp.ne.s32.totalorder %s154, %s155
      %p164 = scmp.eq.s32.totalorder %s34, 0
      %p165 = por %p163, %p164
      %p166 = scmp.ne.s32.totalorder %s154, %s155
      %p167 = scmp.eq.s32.totalorder %s35, 1
      %p168 = por %p166, %p167
      %p170 = scmp.ne.s32.totalorder %s155, %s169
      %p171 = scmp.eq.s32.totalorder %s35, 0
      %p172 = por %p170, %p171
      %s174 = sadd.s32 %s173, 1
      %p177 = scmp.eq.s32.totalorder %s29, 1
      %p178 = scmp.ne.s32.totalorder %s173, %s175
      %p179 = scmp.eq.s32.totalorder %s29, 0
      %p180 = por %p178, %p179
      %p181 = scmp.ne.s32.totalorder %s173, %s175
      %p182 = scmp.eq.s32.totalorder %s34, 1
      %p183 = por %p181, %p182
      %p184 = scmp.ne.s32.totalorder %s175, %s176
      %p185 = scmp.eq.s32.totalorder %s34, 0
      %p186 = por %p184, %p185
      %p187 = scmp.ne.s32.totalorder %s175, %s176
      %p188 = scmp.eq.s32.totalorder %s35, 1
      %p189 = por %p187, %p188
      %p191 = scmp.ne.s32.totalorder %s176, %s190
      %p192 = scmp.eq.s32.totalorder %s35, 0
      %p193 = por %p191, %p192
      %s195 = sadd.s32 %s194, 1
      %p198 = scmp.eq.s32.totalorder %s29, 1
      %p199 = scmp.ne.s32.totalorder %s194, %s196
      %p200 = scmp.eq.s32.totalorder %s29, 0
      %p201 = por %p199, %p200
      %p202 = scmp.ne.s32.totalorder %s194, %s196
      %p203 = scmp.eq.s32.totalorder %s34, 1
      %p204 = por %p202, %p203
      %p205 = scmp.ne.s32.totalorder %s196, %s197
      %p206 = scmp.eq.s32.totalorder %s34, 0
      %p207 = por %p205, %p206
      %p208 = scmp.ne.s32.totalorder %s196, %s197
      %p209 = scmp.eq.s32.totalorder %s35, 1
      %p210 = por %p208, %p209
      %p212 = scmp.ne.s32.totalorder %s197, %s211
      %p213 = scmp.eq.s32.totalorder %s35, 0
      %p214 = por %p212, %p213
      %s215 = ssub.s32 %s29, %s36
      %p216 = scmp.eq.s32.totalorder %s215, 0
      %s218 = sadd.s32 %s217, 1
      %s219 = scalar_select %p216, %s217, %s218
      %p222 = pneg %p216
      %p223 = scmp.eq.s32.totalorder %s29, 1
      %p224 = por %p222, %p223
      %p225 = scmp.ne.s32.totalorder %s217, %s220
      %p226 = scmp.eq.s32.totalorder %s29, 0
      %p227 = por %p225, %p226
      %p228 = scmp.ne.s32.totalorder %s217, %s220
      %p229 = scmp.eq.s32.totalorder %s34, 1
      %p230 = por %p228, %p229
      %p231 = scmp.ne.s32.totalorder %s220, %s221
      %p232 = scmp.eq.s32.totalorder %s34, 0
      %p233 = por %p231, %p232
      %p234 = scmp.ne.s32.totalorder %s220, %s221
      %p235 = scmp.eq.s32.totalorder %s35, 1
      %p236 = por %p234, %p235
      %p238 = scmp.ne.s32.totalorder %s221, %s237
      %p239 = scmp.eq.s32.totalorder %s35, 0
      %p240 = por %p238, %p239
      %s241 = ssub.s32 %s29, %s36
      %p242 = scmp.eq.s32.totalorder %s241, 0
      %s244 = sadd.s32 %s243, 1
      %s245 = scalar_select %p242, %s243, %s244
      %p248 = pneg %p242
      %p249 = scmp.eq.s32.totalorder %s29, 1
      %p250 = por %p248, %p249
      %p251 = scmp.ne.s32.totalorder %s243, %s246
      %p252 = scmp.eq.s32.totalorder %s29, 0
      %p253 = por %p251, %p252
      %p254 = scmp.ne.s32.totalorder %s243, %s246
      %p255 = scmp.eq.s32.totalorder %s34, 1
      %p256 = por %p254, %p255
      %p257 = scmp.ne.s32.totalorder %s246, %s247
      %p258 = scmp.eq.s32.totalorder %s34, 0
      %p259 = por %p257, %p258
      %p260 = scmp.ne.s32.totalorder %s246, %s247
      %p261 = scmp.eq.s32.totalorder %s35, 1
      %p262 = por %p260, %p261
      %p264 = scmp.ne.s32.totalorder %s247, %s263
      %p265 = scmp.eq.s32.totalorder %s35, 0
      %p266 = por %p264, %p265
      %p267 = scmp.le.s32.totalorder 1, %s29
      %p268 = scmp.lt.s32.totalorder %s29, 3
      %p269 = pnand %p267, %p268
      %p270 = pneg %p269
      // Predicated region
      $region9: #{tpu_custom_call.1} parent=5 // pred_check
        _
      $region10: #{tpu_custom_call.1} parent=5 // pred_check_branch
        %272 = sbr.rel (%p269) target = $region12
      $region11: #{tpu_custom_call.1} parent=5 // pred_region
        %s273 = ssub.s32 %s29, 1
        // Predicated region
        $region13: #{tpu_custom_call.1} parent=11 // pred_check
          %p274 = pneg %p102
        $region14: #{tpu_custom_call.1} parent=11 // pred_check_branch
          %276 = sbr.rel (%p274) target = $region16
        $region15: #{tpu_custom_call.1} parent=11 // pred_region
          %s278 = ssub.s32 1536, 1536
          %279 = vsyncadd [#allocation6], %s278
          %s280 = sshll.u32 [#allocation7], 4
          %s281 = int_to_ptr.vmem [resolvable:$true] %s280
          %286 = dma.hbm_to_vmem [thread:$0]  %s2, 1536, %s281, [#allocation6], 128, 128, 8
        $region16: #{tpu_custom_call.1} parent=11 // pred_fallthru
          _
        // Predicated region
        $region17: #{tpu_custom_call.1} parent=11 // pred_check
          %p287 = pneg %p123
        $region18: #{tpu_custom_call.1} parent=11 // pred_check_branch
          %289 = sbr.rel (%p287) target = $region20
        $region19: #{tpu_custom_call.1} parent=11 // pred_region
          _
        $region20: #{tpu_custom_call.1} parent=11 // pred_fallthru
          _
        // Predicated region
        $region21: #{tpu_custom_call.1} parent=11 // pred_check
          %p290 = pneg %p144
        $region22: #{tpu_custom_call.1} parent=11 // pred_check_branch
          %292 = sbr.rel (%p290) target = $region24
        $region23: #{tpu_custom_call.1} parent=11 // pred_region
          %s294 = ssub.s32 512, 512
          %295 = vsyncadd [#allocation9], %s294
          %s296 = sshll.u32 [#allocation8], 4
          %s297 = int_to_ptr.vmem [resolvable:$true] %s296
          %302 = dma.hbm_to_vmem [thread:$0]  %s4, 512, %s297, [#allocation9], 128, 128, 8
        $region24: #{tpu_custom_call.1} parent=11 // pred_fallthru
          _
        // Predicated region
        $region25: #{tpu_custom_call.1} parent=11 // pred_check
          %p303 = pneg %p165
        $region26: #{tpu_custom_call.1} parent=11 // pred_check_branch
          %305 = sbr.rel (%p303) target = $region28
        $region27: #{tpu_custom_call.1} parent=11 // pred_region
          _
        $region28: #{tpu_custom_call.1} parent=11 // pred_fallthru
          _
        // Predicated region
        $region29: #{tpu_custom_call.1} parent=11 // pred_check
          %p306 = pneg %p186
        $region30: #{tpu_custom_call.1} parent=11 // pred_check_branch
          %308 = sbr.rel (%p306) target = $region32
        $region31: #{tpu_custom_call.1} parent=11 // pred_region
          _
        $region32: #{tpu_custom_call.1} parent=11 // pred_fallthru
          _
        // Predicated region
        $region33: #{tpu_custom_call.1} parent=11 // pred_check
          %p309 = pneg %p207
        $region34: #{tpu_custom_call.1} parent=11 // pred_check_branch
          %311 = sbr.rel (%p309) target = $region36
        $region35: #{tpu_custom_call.1} parent=11 // pred_region
          _
        $region36: #{tpu_custom_call.1} parent=11 // pred_fallthru
          _
      $region12: #{tpu_custom_call.1} parent=5 // pred_fallthru
        _
      %p312 = scmp.lt.s32.totalorder %s29, 2
      // Predicated region
      $region37: #{tpu_custom_call.1} parent=5 // pred_check
        %p313 = pneg %p312
      $region38: #{tpu_custom_call.1} parent=5 // pred_check_branch
        %315 = sbr.rel (%p313) target = $region40
      $region39: #{tpu_custom_call.1} parent=5 // pred_region
        // Predicated region
        $region41: #{tpu_custom_call.1} parent=39 // pred_check
          %p316 = pneg %p49
        $region42: #{tpu_custom_call.1} parent=39 // pred_check_branch
          %318 = sbr.rel (%p316) target = $region44
        $region43: #{tpu_custom_call.1} parent=39 // pred_region
          %s319 = sand.u32 %s39, 1
          %s320 = scalar_lea.sflag [#allocation3], %s319
          %s321 = sand.u32 %s39, 1
          %s322 = smul.addr %s321, 8
          %s323 = scalar_lea.vmem [#allocation2], %s322
          %s325 = ssub.s32 128, 128
          %326 = vsyncadd %s320, %s325
          %s327 = smul.addr %s29, 128
          %s328 = scalar_lea.hbm %s0, %s327
          %s330 = sshll.u32 %s323, 4
          %s331 = int_to_ptr.vmem [resolvable:$true] %s330
          %333 = dma.hbm_to_vmem [thread:$0]  %s328, 128, %s331, %s320
        $region44: #{tpu_custom_call.1} parent=39 // pred_fallthru
          _
        // Predicated region
        $region45: #{tpu_custom_call.1} parent=39 // pred_check
          %p334 = pneg %p75
        $region46: #{tpu_custom_call.1} parent=39 // pred_check_branch
          %336 = sbr.rel (%p334) target = $region48
        $region47: #{tpu_custom_call.1} parent=39 // pred_region
          %s337 = sand.u32 %s29, 1
          %s338 = scalar_lea.sflag [#allocation6], %s337
          %s339 = sand.u32 %s65, 1
          %s340 = smul.addr %s339, 8
          %s341 = scalar_lea.vmem [#allocation5], %s340
          %s343 = ssub.s32 128, 128
          %344 = vsyncadd %s338, %s343
          %s345 = smul.addr %s29, 128
          %s346 = scalar_lea.hbm %s1, %s345
          %s348 = sshll.u32 %s341, 4
          %s349 = int_to_ptr.vmem [resolvable:$true] %s348
          %351 = dma.hbm_to_vmem [thread:$0]  %s346, 128, %s349, %s338
        $region48: #{tpu_custom_call.1} parent=39 // pred_fallthru
          _
      $region40: #{tpu_custom_call.1} parent=5 // pred_fallthru
        _
      %p352 = scmp.le.s32.totalorder 1, %s29
      %p353 = scmp.lt.s32.totalorder %s29, 3
      %p354 = pnand %p352, %p353
      %p355 = pneg %p354
      // Predicated region
      $region49: #{tpu_custom_call.1} parent=5 // pred_check
        _
      $region50: #{tpu_custom_call.1} parent=5 // pred_check_branch
        %357 = sbr.rel (%p354) target = $region52
      $region51: #{tpu_custom_call.1} parent=5 // pred_region
        %s358 = ssub.s32 %s29, 1
        %s359 = sand.u32 %s42, 1
        %s360 = scalar_lea.sflag [#allocation3], %s359
        %s361 = sand.u32 %s42, 1
        %s362 = smul.addr %s361, 8
        %s363 = scalar_lea.vmem [#allocation2], %s362
        // Predicated region
        $region53: #{tpu_custom_call.1} parent=51 // pred_check
          %p364 = pneg %p55
        $region54: #{tpu_custom_call.1} parent=51 // pred_check_branch
          %366 = sbr.rel (%p364) target = $region56
        $region55: #{tpu_custom_call.1} parent=51 // pred_region
          %367 = dma.done %s360, 128
        $region56: #{tpu_custom_call.1} parent=51 // pred_fallthru
          _
        %s368 = sand.u32 %s34, 1
        %s369 = scalar_lea.sflag [#allocation6], %s368
        %s370 = sand.u32 %s68, 1
        %s371 = smul.addr %s370, 8
        %s372 = scalar_lea.vmem [#allocation5], %s371
        // Predicated region
        $region57: #{tpu_custom_call.1} parent=51 // pred_check
          %p373 = pneg %p81
        $region58: #{tpu_custom_call.1} parent=51 // pred_check_branch
          %375 = sbr.rel (%p373) target = $region60
        $region59: #{tpu_custom_call.1} parent=51 // pred_region
          %376 = dma.done %s369, 128
        $region60: #{tpu_custom_call.1} parent=51 // pred_fallthru
          _
        // Predicated region
        $region61: #{tpu_custom_call.1} parent=51 // pred_check
          %p377 = pneg %p102
        $region62: #{tpu_custom_call.1} parent=51 // pred_check_branch
          %379 = sbr.rel (%p377) target = $region64
        $region63: #{tpu_custom_call.1} parent=51 // pred_region
          %380 = dma.done [#allocation6], 1536
        $region64: #{tpu_custom_call.1} parent=51 // pred_fallthru
          _
        // Predicated region
        $region65: #{tpu_custom_call.1} parent=51 // pred_check
          %p381 = pneg %p144
        $region66: #{tpu_custom_call.1} parent=51 // pred_check_branch
          %383 = sbr.rel (%p381) target = $region68
        $region67: #{tpu_custom_call.1} parent=51 // pred_region
          %384 = dma.done [#allocation9], 512
        $region68: #{tpu_custom_call.1} parent=51 // pred_fallthru
          _
        %s385 = sand.u32 %s42, 1
        %s386 = scalar_lea.sflag [#allocation3], %s385
        %s387 = sand.u32 %s42, 1
        %s388 = smul.addr %s387, 8
        %s389 = scalar_lea.vmem [#allocation2], %s388
        %p390 = pneg %p55
        %p391 = pneg %p52
        %s392 = sand.u32 %s34, 1
        %s393 = scalar_lea.sflag [#allocation6], %s392
        %s394 = sand.u32 %s68, 1
        %s395 = smul.addr %s394, 8
        %s396 = scalar_lea.vmem [#allocation5], %s395
        %p397 = pneg %p81
        %p398 = pneg %p78
        %p399 = pneg %p102
        %p400 = pneg %p99
        %p401 = pneg %p123
        %p402 = pneg %p120
        %p403 = pneg %p144
        %p404 = pneg %p141
        %p405 = pneg %p165
        %p406 = pneg %p162
        %p407 = pneg %p186
        %p408 = pneg %p183
        %p409 = pneg %p207
        %p410 = pneg %p204
        %p411 = pneg %p233
        %p412 = pneg %p230
        %s413 = sand.u32 %s220, 1
        %s414 = scalar_lea.sflag [#allocation4], %s413
        %s415 = sand.u32 %s220, 1
        %s416 = smul.addr %s415, 8
        %s417 = scalar_lea.vmem [#allocation10], %s416
        %p418 = pneg %p259
        %p419 = pneg %p256
        %s420 = sand.u32 %s246, 1
        %s421 = scalar_lea.sflag [#allocation12], %s420
        %s422 = sand.u32 %s246, 1
        %s423 = smul.addr %s422, 32
        %s424 = scalar_lea.vmem [#allocation11], %s423
        %v425 = vld [vmem:[%s363] sm:$0xff]
        %v426 = vld [vmem:[#allocation7] sm:$0xff]
        %v427 = vld [vmem:[#allocation7 + $0x8] sm:$0xff]
        %v428 = vld [vmem:[#allocation7 + $0x10] sm:$0xff]
        %v429 = vld [vmem:[#allocation7 + $0x18] sm:$0xff]
        %v430 = vld [vmem:[#allocation7 + $0x20] sm:$0xff]
        %v431 = vld [vmem:[#allocation7 + $0x28] sm:$0xff]
        %v432 = vld [vmem:[#allocation7 + $0x30] sm:$0xff]
        %v433 = vld [vmem:[#allocation7 + $0x38] sm:$0xff]
        %v434 = vld [vmem:[#allocation7 + $0x40] sm:$0xff]
        %v435 = vld [vmem:[#allocation7 + $0x48] sm:$0xff]
        %v436 = vld [vmem:[#allocation7 + $0x50] sm:$0xff]
        %v437 = vld [vmem:[#allocation7 + $0x58] sm:$0xff]
        %v438 = vld [vmem:[%s3] sm:$0x1]
        %v440 = vlaneseq
        %v441 = vshrl.u32 %v440, 7
        %v442 = vsub.s32 0, %v441
        %v443 = vrot.slane %v438, %v442
        %vm445 = vcmask 785408
        %v447 = vsel %vm445, %v425, 0
        %449 = vmatprep.subr.mxu0 0.0
        %450 = vmatpush1.msra.mxu0 %v426
        %451 = vmatprep.subr.mxu0 0.0
        %452 = vmatpush1.msra.mxu0 %v427
        %453 = vmatprep.subr.mxu0 0.0
        %454 = vmatpush1.msra.mxu0 %v428
        %455 = vmatprep.subr.mxu0 0.0
        %456 = vmatpush1.msra.mxu0 %v429
        %457 = vmatprep.subr.mxu0 0.0
        %458 = vmatpush1.msra.mxu0 %v430
        %459 = vmatprep.subr.mxu0 0.0
        %460 = vmatpush1.msra.mxu0 %v431
        %461 = vmatprep.subr.mxu0 0.0
        %462 = vmatpush1.msra.mxu0 %v432
        %463 = vmatprep.subr.mxu0 0.0
        %464 = vmatpush1.msra.mxu0 %v433
        %465 = vmatprep.subr.mxu0 0.0
        %466 = vmatpush1.msra.mxu0 %v434
        %467 = vmatprep.subr.mxu0 0.0
        %468 = vmatpush1.msra.mxu0 %v435
        %469 = vmatprep.subr.mxu0 0.0
        %470 = vmatpush1.msra.mxu0 %v436
        %471 = vmatprep.subr.mxu0 0.0
        %472 = vmatpush1.msra.mxu0 %v437
        %473 = vmatprep.subr.mxu0 0.0
        %474 = vmatpush1.msra.mxu0 0.0
        %475 = vmatprep.subr.mxu0 0.0
        %476 = vmatpush1.msra.mxu0 0.0
        %477 = vmatprep.subr.mxu0 0.0
        %478 = vmatpush1.msra.mxu0 0.0
        %479 = vmatprep.subr.mxu0 0.0
        %480 = vmatpush1.msra.mxu0 0.0
        %481 = vmatprep.subr.mxu0 0.0
        %482 = vmatpush1.msra.mxu0 0.0
        %483 = vmatprep.subr.mxu0 0.0
        %484 = vmatpush1.msra.mxu0 0.0
        %485 = vmatprep.subr.mxu0 0.0
        %486 = vmatpush1.msra.mxu0 0.0
        %487 = vmatprep.subr.mxu0 0.0
        %488 = vmatpush1.msra.mxu0 0.0
        %489 = vmatprep.subr.mxu0 0.0
        %490 = vmatpush1.msra.mxu0 0.0
        %491 = vmatprep.subr.mxu0 0.0
        %492 = vmatpush1.msra.mxu0 0.0
        %493 = vmatprep.subr.mxu0 0.0
        %494 = vmatpush1.msra.mxu0 0.0
        %495 = vmatprep.subr.mxu0 0.0
        %496 = vmatpush1.msra.mxu0 0.0
        %497 = vmatprep.subr.mxu0 0.0
        %498 = vmatpush1.msra.mxu0 0.0
        %499 = vmatprep.subr.mxu0 0.0
        %500 = vmatpush1.msra.mxu0 0.0
        %501 = vmatprep.subr.mxu0 0.0
        %502 = vmatpush1.msra.mxu0 0.0
        %503 = vmatprep.subr.mxu0 0.0
        %504 = vmatpush1.msra.mxu0 0.0
        %505 = vmatprep.subr.mxu0 0.0
        %506 = vmatpush1.msra.mxu0 0.0
        %507 = vmatprep.subr.mxu0 0.0
        %508 = vmatpush1.msra.mxu0 0.0
        %509 = vmatprep.subr.mxu0 0.0
        %510 = vmatpush1.msra.mxu0 0.0
        %511 = vmatprep.subr.mxu0 0.0
        %512 = vmatpush1.msra.mxu0 0.0
        %513 = vmatprep.mubr.f32.mxu0 0.0
        %514 = vmatmul.mubr.f32.gmra.mrb[0].mxu0 %v447
        %v515 = vpop.f32.mrb[0].mxu0
        %v516 = vadd.f32 %v443, %v515
        %v517 = vpop.f32.mrb[0].mxu0
        %518 = vdwg.mxu0
        %v519 = vld [vmem:[%s372] sm:$0xff]
        %vm520 = vcmp.ne.s32.totalorder %v519, 0
        %522 = vrot.lane.b32.xlu0 %v516, 96
        %v523 = vpop.permute.xlu0 %522
        %vm524 = vcmask 64512
        %v525 = vsel %vm524, %v516, 0
        %v527 = vsel %vm524, %v523, 0
        %529 = vmatprep.subr.mxu0 0.0
        %530 = vmatpush1.xpose.msra.mxu0 %v527
        %531 = vmatprep.subr.mxu0 0.0
        %532 = vmatpush1.xpose.msra.mxu0 0.0
        %533 = vmatprep.subr.mxu0 0.0
        %534 = vmatpush1.xpose.msra.mxu0 0.0
        %535 = vmatprep.subr.mxu0 0.0
        %536 = vmatpush1.xpose.msra.mxu0 0.0
        %537 = vmatprep.subr.mxu0 0.0
        %538 = vmatpush1.xpose.msra.mxu0 0.0
        %539 = vmatprep.subr.mxu0 0.0
        %540 = vmatpush1.xpose.msra.mxu0 0.0
        %541 = vmatprep.subr.mxu0 0.0
        %542 = vmatpush1.xpose.msra.mxu0 0.0
        %543 = vmatprep.subr.mxu0 0.0
        %544 = vmatpush1.xpose.msra.mxu0 0.0
        %545 = vmatprep.subr.mxu0 0.0
        %546 = vmatpush1.xpose.msra.mxu0 0.0
        %547 = vmatprep.subr.mxu0 0.0
        %548 = vmatpush1.xpose.msra.mxu0 0.0
        %549 = vmatprep.subr.mxu0 0.0
        %550 = vmatpush1.xpose.msra.mxu0 0.0
        %551 = vmatprep.subr.mxu0 0.0
        %552 = vmatpush1.xpose.msra.mxu0 0.0
        %553 = vmatprep.subr.mxu0 0.0
        %554 = vmatpush1.xpose.msra.mxu0 0.0
        %555 = vmatprep.subr.mxu0 0.0
        %556 = vmatpush1.xpose.msra.mxu0 0.0
        %557 = vmatprep.subr.mxu0 0.0
        %558 = vmatpush1.xpose.msra.mxu0 0.0
        %559 = vmatprep.subr.mxu0 0.0
        %560 = vmatpush1.xpose.msra.mxu0 0.0
        %561 = vmatprep.subr.mxu0 0.0
        %562 = vmatpush1.xpose.msra.mxu0 0.0
        %563 = vmatprep.subr.mxu0 0.0
        %564 = vmatpush1.xpose.msra.mxu0 0.0
        %565 = vmatprep.subr.mxu0 0.0
        %566 = vmatpush1.xpose.msra.mxu0 0.0
        %567 = vmatprep.subr.mxu0 0.0
        %568 = vmatpush1.xpose.msra.mxu0 0.0
        %569 = vmatprep.subr.mxu0 0.0
        %570 = vmatpush1.xpose.msra.mxu0 0.0
        %571 = vmatprep.subr.mxu0 0.0
        %572 = vmatpush1.xpose.msra.mxu0 0.0
        %573 = vmatprep.subr.mxu0 0.0
        %574 = vmatpush1.xpose.msra.mxu0 0.0
        %575 = vmatprep.subr.mxu0 0.0
        %576 = vmatpush1.xpose.msra.mxu0 0.0
        %577 = vmatprep.subr.mxu0 0.0
        %578 = vmatpush1.xpose.msra.mxu0 0.0
        %579 = vmatprep.subr.mxu0 0.0
        %580 = vmatpush1.xpose.msra.mxu0 0.0
        %581 = vmatprep.subr.mxu0 0.0
        %582 = vmatpush1.xpose.msra.mxu0 0.0
        %583 = vmatprep.subr.mxu0 0.0
        %584 = vmatpush1.xpose.msra.mxu0 0.0
        %585 = vmatprep.subr.mxu0 0.0
        %586 = vmatpush1.xpose.msra.mxu0 0.0
        %587 = vmatprep.subr.mxu0 0.0
        %588 = vmatpush1.xpose.msra.mxu0 0.0
        %589 = vmatprep.subr.mxu0 0.0
        %590 = vmatpush1.xpose.msra.mxu0 0.0
        %591 = vmatprep.subr.mxu0 0.0
        %592 = vmatpush1.xpose.msra.mxu0 0.0
        %593 = vmatprep.mubr.f32.mxu0 0.0
        %594 = vmatmul.mubr.f32.gmra.mrb[0].mxu0 %v525
        %v595 = vpop.f32.mrb[0].mxu0
        %v596 = vadd.f32 0.0, %v595
        %v597 = vpop.f32.mrb[0].mxu0
        %598 = vdwg.mxu0
        %v599 = vmul.f32 %v596, 0.35355338
        %v600 = vsel %vm520, -1e+09, %v599
        %v601 = vsel %vm524, %v600, -inf
        %602 = vmax.xlane.f32.xlu0 %v601
        %v603 = vpop.xlane.xlu0 %602
        %v604 = vsub.f32 %v600, %v603
        %v605 = vmul.f32 %v604, 1.442695
        %v606 = vpow.pop %v605
        %v607 = vsel %vm524, %v606, 0.0
        %608 = vadd.xlane.f32.xlu0 %v607
        %v609 = vpop.xlane.xlu0 %608
        %v610 = vrcp.pop %v609
        %v611 = vmul.f32 %v606, %v610
        %612 = vst.msk [vmem:[%s424] sm:$0xff] %vm524, %v611
        %613 = vrot.lane.b32.xlu0 %v516, 64
        %v614 = vpop.permute.xlu0 %613
        %v617 = vsel %vm524, %v611, 0
        %619 = vmatprep.subr.mxu0 0.0
        %620 = vmatpush1.msra.mxu0 %v614
        %621 = vmatprep.subr.mxu0 0.0
        %622 = vmatpush1.msra.mxu0 0.0
        %623 = vmatprep.subr.mxu0 0.0
        %624 = vmatpush1.msra.mxu0 0.0
        %625 = vmatprep.subr.mxu0 0.0
        %626 = vmatpush1.msra.mxu0 0.0
        %627 = vmatprep.subr.mxu0 0.0
        %628 = vmatpush1.msra.mxu0 0.0
        %629 = vmatprep.subr.mxu0 0.0
        %630 = vmatpush1.msra.mxu0 0.0
        %631 = vmatprep.subr.mxu0 0.0
        %632 = vmatpush1.msra.mxu0 0.0
        %633 = vmatprep.subr.mxu0 0.0
        %634 = vmatpush1.msra.mxu0 0.0
        %635 = vmatprep.subr.mxu0 0.0
        %636 = vmatpush1.msra.mxu0 0.0
        %637 = vmatprep.subr.mxu0 0.0
        %638 = vmatpush1.msra.mxu0 0.0
        %639 = vmatprep.subr.mxu0 0.0
        %640 = vmatpush1.msra.mxu0 0.0
        %641 = vmatprep.subr.mxu0 0.0
        %642 = vmatpush1.msra.mxu0 0.0
        %643 = vmatprep.subr.mxu0 0.0
        %644 = vmatpush1.msra.mxu0 0.0
        %645 = vmatprep.subr.mxu0 0.0
        %646 = vmatpush1.msra.mxu0 0.0
        %647 = vmatprep.subr.mxu0 0.0
        %648 = vmatpush1.msra.mxu0 0.0
        %649 = vmatprep.subr.mxu0 0.0
        %650 = vmatpush1.msra.mxu0 0.0
        %651 = vmatprep.subr.mxu0 0.0
        %652 = vmatpush1.msra.mxu0 0.0
        %653 = vmatprep.subr.mxu0 0.0
        %654 = vmatpush1.msra.mxu0 0.0
        %655 = vmatprep.subr.mxu0 0.0
        %656 = vmatpush1.msra.mxu0 0.0
        %657 = vmatprep.subr.mxu0 0.0
        %658 = vmatpush1.msra.mxu0 0.0
        %659 = vmatprep.subr.mxu0 0.0
        %660 = vmatpush1.msra.mxu0 0.0
        %661 = vmatprep.subr.mxu0 0.0
        %662 = vmatpush1.msra.mxu0 0.0
        %663 = vmatprep.subr.mxu0 0.0
        %664 = vmatpush1.msra.mxu0 0.0
        %665 = vmatprep.subr.mxu0 0.0
        %666 = vmatpush1.msra.mxu0 0.0
        %667 = vmatprep.subr.mxu0 0.0
        %668 = vmatpush1.msra.mxu0 0.0
        %669 = vmatprep.subr.mxu0 0.0
        %670 = vmatpush1.msra.mxu0 0.0
        %671 = vmatprep.subr.mxu0 0.0
        %672 = vmatpush1.msra.mxu0 0.0
        %673 = vmatprep.subr.mxu0 0.0
        %674 = vmatpush1.msra.mxu0 0.0
        %675 = vmatprep.subr.mxu0 0.0
        %676 = vmatpush1.msra.mxu0 0.0
        %677 = vmatprep.subr.mxu0 0.0
        %678 = vmatpush1.msra.mxu0 0.0
        %679 = vmatprep.subr.mxu0 0.0
        %680 = vmatpush1.msra.mxu0 0.0
        %681 = vmatprep.subr.mxu0 0.0
        %682 = vmatpush1.msra.mxu0 0.0
        %683 = vmatprep.mubr.f32.mxu0 0.0
        %684 = vmatmul.mubr.f32.gmra.mrb[0].mxu0 %v617
        %v685 = vpop.f32.mrb[0].mxu0
        %v686 = vadd.f32 0.0, %v685
        %v687 = vpop.f32.mrb[0].mxu0
        %688 = vdwg.mxu0
        %689 = vrot.lane.b32.xlu0 %v516, 120
        %v690 = vpop.permute.xlu0 %689
        %691 = vrot.lane.b32.xlu0 %v516, 88
        %v692 = vpop.permute.xlu0 %691
        %v693 = vsel %vm524, %v690, 0
        %v695 = vsel %vm524, %v692, 0
        %697 = vmatprep.subr.mxu0 0.0
        %698 = vmatpush1.xpose.msra.mxu0 %v695
        %699 = vmatprep.subr.mxu0 0.0
        %700 = vmatpush1.xpose.msra.mxu0 0.0
        %701 = vmatprep.subr.mxu0 0.0
        %702 = vmatpush1.xpose.msra.mxu0 0.0
        %703 = vmatprep.subr.mxu0 0.0
        %704 = vmatpush1.xpose.msra.mxu0 0.0
        %705 = vmatprep.subr.mxu0 0.0
        %706 = vmatpush1.xpose.msra.mxu0 0.0
        %707 = vmatprep.subr.mxu0 0.0
        %708 = vmatpush1.xpose.msra.mxu0 0.0
        %709 = vmatprep.subr.mxu0 0.0
        %710 = vmatpush1.xpose.msra.mxu0 0.0
        %711 = vmatprep.subr.mxu0 0.0
        %712 = vmatpush1.xpose.msra.mxu0 0.0
        %713 = vmatprep.subr.mxu0 0.0
        %714 = vmatpush1.xpose.msra.mxu0 0.0
        %715 = vmatprep.subr.mxu0 0.0
        %716 = vmatpush1.xpose.msra.mxu0 0.0
        %717 = vmatprep.subr.mxu0 0.0
        %718 = vmatpush1.xpose.msra.mxu0 0.0
        %719 = vmatprep.subr.mxu0 0.0
        %720 = vmatpush1.xpose.msra.mxu0 0.0
        %721 = vmatprep.subr.mxu0 0.0
        %722 = vmatpush1.xpose.msra.mxu0 0.0
        %723 = vmatprep.subr.mxu0 0.0
        %724 = vmatpush1.xpose.msra.mxu0 0.0
        %725 = vmatprep.subr.mxu0 0.0
        %726 = vmatpush1.xpose.msra.mxu0 0.0
        %727 = vmatprep.subr.mxu0 0.0
        %728 = vmatpush1.xpose.msra.mxu0 0.0
        %729 = vmatprep.subr.mxu0 0.0
        %730 = vmatpush1.xpose.msra.mxu0 0.0
        %731 = vmatprep.subr.mxu0 0.0
        %732 = vmatpush1.xpose.msra.mxu0 0.0
        %733 = vmatprep.subr.mxu0 0.0
        %734 = vmatpush1.xpose.msra.mxu0 0.0
        %735 = vmatprep.subr.mxu0 0.0
        %736 = vmatpush1.xpose.msra.mxu0 0.0
        %737 = vmatprep.subr.mxu0 0.0
        %738 = vmatpush1.xpose.msra.mxu0 0.0
        %739 = vmatprep.subr.mxu0 0.0
        %740 = vmatpush1.xpose.msra.mxu0 0.0
        %741 = vmatprep.subr.mxu0 0.0
        %742 = vmatpush1.xpose.msra.mxu0 0.0
        %743 = vmatprep.subr.mxu0 0.0
        %744 = vmatpush1.xpose.msra.mxu0 0.0
        %745 = vmatprep.subr.mxu0 0.0
        %746 = vmatpush1.xpose.msra.mxu0 0.0
        %747 = vmatprep.subr.mxu0 0.0
        %748 = vmatpush1.xpose.msra.mxu0 0.0
        %749 = vmatprep.subr.mxu0 0.0
        %750 = vmatpush1.xpose.msra.mxu0 0.0
        %751 = vmatprep.subr.mxu0 0.0
        %752 = vmatpush1.xpose.msra.mxu0 0.0
        %753 = vmatprep.subr.mxu0 0.0
        %754 = vmatpush1.xpose.msra.mxu0 0.0
        %755 = vmatprep.subr.mxu0 0.0
        %756 = vmatpush1.xpose.msra.mxu0 0.0
        %757 = vmatprep.subr.mxu0 0.0
        %758 = vmatpush1.xpose.msra.mxu0 0.0
        %759 = vmatprep.subr.mxu0 0.0
        %760 = vmatpush1.xpose.msra.mxu0 0.0
        %761 = vmatprep.mubr.f32.mxu0 0.0
        %762 = vmatmul.mubr.f32.gmra.mrb[0].mxu0 %v693
        %v763 = vpop.f32.mrb[0].mxu0
        %v764 = vadd.f32 0.0, %v763
        %v765 = vpop.f32.mrb[0].mxu0
        %766 = vdwg.mxu0
        %v767 = vmul.f32 %v764, 0.35355338
        %v768 = vsel %vm520, -1e+09, %v767
        %v769 = vsel %vm524, %v768, -inf
        %770 = vmax.xlane.f32.xlu0 %v769
        %v771 = vpop.xlane.xlu0 %770
        %v772 = vsub.f32 %v768, %v771
        %v773 = vmul.f32 %v772, 1.442695
        %v774 = vpow.pop %v773
        %v775 = vsel %vm524, %v774, 0.0
        %776 = vadd.xlane.f32.xlu0 %v775
        %v777 = vpop.xlane.xlu0 %776
        %v778 = vrcp.pop %v777
        %v779 = vmul.f32 %v774, %v778
        %s780 = scalar_lea.vmem %s424, 8 [#allocation11]
        %781 = vst.msk [vmem:[%s780] sm:$0xff] %vm524, %v779
        %782 = vrot.lane.b32.xlu0 %v516, 56
        %v783 = vpop.permute.xlu0 %782
        %v786 = vsel %vm524, %v779, 0
        %788 = vmatprep.subr.mxu0 0.0
        %789 = vmatpush1.msra.mxu0 %v783
        %790 = vmatprep.subr.mxu0 0.0
        %791 = vmatpush1.msra.mxu0 0.0
        %792 = vmatprep.subr.mxu0 0.0
        %793 = vmatpush1.msra.mxu0 0.0
        %794 = vmatprep.subr.mxu0 0.0
        %795 = vmatpush1.msra.mxu0 0.0
        %796 = vmatprep.subr.mxu0 0.0
        %797 = vmatpush1.msra.mxu0 0.0
        %798 = vmatprep.subr.mxu0 0.0
        %799 = vmatpush1.msra.mxu0 0.0
        %800 = vmatprep.subr.mxu0 0.0
        %801 = vmatpush1.msra.mxu0 0.0
        %802 = vmatprep.subr.mxu0 0.0
        %803 = vmatpush1.msra.mxu0 0.0
        %804 = vmatprep.subr.mxu0 0.0
        %805 = vmatpush1.msra.mxu0 0.0
        %806 = vmatprep.subr.mxu0 0.0
        %807 = vmatpush1.msra.mxu0 0.0
        %808 = vmatprep.subr.mxu0 0.0
        %809 = vmatpush1.msra.mxu0 0.0
        %810 = vmatprep.subr.mxu0 0.0
        %811 = vmatpush1.msra.mxu0 0.0
        %812 = vmatprep.subr.mxu0 0.0
        %813 = vmatpush1.msra.mxu0 0.0
        %814 = vmatprep.subr.mxu0 0.0
        %815 = vmatpush1.msra.mxu0 0.0
        %816 = vmatprep.subr.mxu0 0.0
        %817 = vmatpush1.msra.mxu0 0.0
        %818 = vmatprep.subr.mxu0 0.0
        %819 = vmatpush1.msra.mxu0 0.0
        %820 = vmatprep.subr.mxu0 0.0
        %821 = vmatpush1.msra.mxu0 0.0
        %822 = vmatprep.subr.mxu0 0.0
        %823 = vmatpush1.msra.mxu0 0.0
        %824 = vmatprep.subr.mxu0 0.0
        %825 = vmatpush1.msra.mxu0 0.0
        %826 = vmatprep.subr.mxu0 0.0
        %827 = vmatpush1.msra.mxu0 0.0
        %828 = vmatprep.subr.mxu0 0.0
        %829 = vmatpush1.msra.mxu0 0.0
        %830 = vmatprep.subr.mxu0 0.0
        %831 = vmatpush1.msra.mxu0 0.0
        %832 = vmatprep.subr.mxu0 0.0
        %833 = vmatpush1.msra.mxu0 0.0
        %834 = vmatprep.subr.mxu0 0.0
        %835 = vmatpush1.msra.mxu0 0.0
        %836 = vmatprep.subr.mxu0 0.0
        %837 = vmatpush1.msra.mxu0 0.0
        %838 = vmatprep.subr.mxu0 0.0
        %839 = vmatpush1.msra.mxu0 0.0
        %840 = vmatprep.subr.mxu0 0.0
        %841 = vmatpush1.msra.mxu0 0.0
        %842 = vmatprep.subr.mxu0 0.0
        %843 = vmatpush1.msra.mxu0 0.0
        %844 = vmatprep.subr.mxu0 0.0
        %845 = vmatpush1.msra.mxu0 0.0
        %846 = vmatprep.subr.mxu0 0.0
        %847 = vmatpush1.msra.mxu0 0.0
        %848 = vmatprep.subr.mxu0 0.0
        %849 = vmatpush1.msra.mxu0 0.0
        %850 = vmatprep.subr.mxu0 0.0
        %851 = vmatpush1.msra.mxu0 0.0
        %852 = vmatprep.mubr.f32.mxu0 0.0
        %853 = vmatmul.mubr.f32.gmra.mrb[0].mxu0 %v786
        %v854 = vpop.f32.mrb[0].mxu0
        %v855 = vadd.f32 0.0, %v854
        %v856 = vpop.f32.mrb[0].mxu0
        %857 = vdwg.mxu0
        %858 = vrot.lane.b32.xlu0 %v516, 112
        %v859 = vpop.permute.xlu0 %858
        %860 = vrot.lane.b32.xlu0 %v516, 80
        %v861 = vpop.permute.xlu0 %860
        %v862 = vsel %vm524, %v859, 0
        %v864 = vsel %vm524, %v861, 0
        %866 = vmatprep.subr.mxu0 0.0
        %867 = vmatpush1.xpose.msra.mxu0 %v864
        %868 = vmatprep.subr.mxu0 0.0
        %869 = vmatpush1.xpose.msra.mxu0 0.0
        %870 = vmatprep.subr.mxu0 0.0
        %871 = vmatpush1.xpose.msra.mxu0 0.0
        %872 = vmatprep.subr.mxu0 0.0
        %873 = vmatpush1.xpose.msra.mxu0 0.0
        %874 = vmatprep.subr.mxu0 0.0
        %875 = vmatpush1.xpose.msra.mxu0 0.0
        %876 = vmatprep.subr.mxu0 0.0
        %877 = vmatpush1.xpose.msra.mxu0 0.0
        %878 = vmatprep.subr.mxu0 0.0
        %879 = vmatpush1.xpose.msra.mxu0 0.0
        %880 = vmatprep.subr.mxu0 0.0
        %881 = vmatpush1.xpose.msra.mxu0 0.0
        %882 = vmatprep.subr.mxu0 0.0
        %883 = vmatpush1.xpose.msra.mxu0 0.0
        %884 = vmatprep.subr.mxu0 0.0
        %885 = vmatpush1.xpose.msra.mxu0 0.0
        %886 = vmatprep.subr.mxu0 0.0
        %887 = vmatpush1.xpose.msra.mxu0 0.0
        %888 = vmatprep.subr.mxu0 0.0
        %889 = vmatpush1.xpose.msra.mxu0 0.0
        %890 = vmatprep.subr.mxu0 0.0
        %891 = vmatpush1.xpose.msra.mxu0 0.0
        %892 = vmatprep.subr.mxu0 0.0
        %893 = vmatpush1.xpose.msra.mxu0 0.0
        %894 = vmatprep.subr.mxu0 0.0
        %895 = vmatpush1.xpose.msra.mxu0 0.0
        %896 = vmatprep.subr.mxu0 0.0
        %897 = vmatpush1.xpose.msra.mxu0 0.0
        %898 = vmatprep.subr.mxu0 0.0
        %899 = vmatpush1.xpose.msra.mxu0 0.0
        %900 = vmatprep.subr.mxu0 0.0
        %901 = vmatpush1.xpose.msra.mxu0 0.0
        %902 = vmatprep.subr.mxu0 0.0
        %903 = vmatpush1.xpose.msra.mxu0 0.0
        %904 = vmatprep.subr.mxu0 0.0
        %905 = vmatpush1.xpose.msra.mxu0 0.0
        %906 = vmatprep.subr.mxu0 0.0
        %907 = vmatpush1.xpose.msra.mxu0 0.0
        %908 = vmatprep.subr.mxu0 0.0
        %909 = vmatpush1.xpose.msra.mxu0 0.0
        %910 = vmatprep.subr.mxu0 0.0
        %911 = vmatpush1.xpose.msra.mxu0 0.0
        %912 = vmatprep.subr.mxu0 0.0
        %913 = vmatpush1.xpose.msra.mxu0 0.0
        %914 = vmatprep.subr.mxu0 0.0
        %915 = vmatpush1.xpose.msra.mxu0 0.0
        %916 = vmatprep.subr.mxu0 0.0
        %917 = vmatpush1.xpose.msra.mxu0 0.0
        %918 = vmatprep.subr.mxu0 0.0
        %919 = vmatpush1.xpose.msra.mxu0 0.0
        %920 = vmatprep.subr.mxu0 0.0
        %921 = vmatpush1.xpose.msra.mxu0 0.0
        %922 = vmatprep.subr.mxu0 0.0
        %923 = vmatpush1.xpose.msra.mxu0 0.0
        %924 = vmatprep.subr.mxu0 0.0
        %925 = vmatpush1.xpose.msra.mxu0 0.0
        %926 = vmatprep.subr.mxu0 0.0
        %927 = vmatpush1.xpose.msra.mxu0 0.0
        %928 = vmatprep.subr.mxu0 0.0
        %929 = vmatpush1.xpose.msra.mxu0 0.0
        %930 = vmatprep.mubr.f32.mxu0 0.0
        %931 = vmatmul.mubr.f32.gmra.mrb[0].mxu0 %v862
        %v932 = vpop.f32.mrb[0].mxu0
        %v933 = vadd.f32 0.0, %v932
        %v934 = vpop.f32.mrb[0].mxu0
        %935 = vdwg.mxu0
        %v936 = vmul.f32 %v933, 0.35355338
        %v937 = vsel %vm520, -1e+09, %v936
        %v938 = vsel %vm524, %v937, -inf
        %939 = vmax.xlane.f32.xlu0 %v938
        %v940 = vpop.xlane.xlu0 %939
        %v941 = vsub.f32 %v937, %v940
        %v942 = vmul.f32 %v941, 1.442695
        %v943 = vpow.pop %v942
        %v944 = vsel %vm524, %v943, 0.0
        %945 = vadd.xlane.f32.xlu0 %v944
        %v946 = vpop.xlane.xlu0 %945
        %v947 = vrcp.pop %v946
        %v948 = vmul.f32 %v943, %v947
        %s949 = scalar_lea.vmem %s424, 16 [#allocation11]
        %950 = vst.msk [vmem:[%s949] sm:$0xff] %vm524, %v948
        %951 = vrot.lane.b32.xlu0 %v516, 48
        %v952 = vpop.permute.xlu0 %951
        %v955 = vsel %vm524, %v948, 0
        %957 = vmatprep.subr.mxu0 0.0
        %958 = vmatpush1.msra.mxu0 %v952
        %959 = vmatprep.subr.mxu0 0.0
        %960 = vmatpush1.msra.mxu0 0.0
        %961 = vmatprep.subr.mxu0 0.0
        %962 = vmatpush1.msra.mxu0 0.0
        %963 = vmatprep.subr.mxu0 0.0
        %964 = vmatpush1.msra.mxu0 0.0
        %965 = vmatprep.subr.mxu0 0.0
        %966 = vmatpush1.msra.mxu0 0.0
        %967 = vmatprep.subr.mxu0 0.0
        %968 = vmatpush1.msra.mxu0 0.0
        %969 = vmatprep.subr.mxu0 0.0
        %970 = vmatpush1.msra.mxu0 0.0
        %971 = vmatprep.subr.mxu0 0.0
        %972 = vmatpush1.msra.mxu0 0.0
        %973 = vmatprep.subr.mxu0 0.0
        %974 = vmatpush1.msra.mxu0 0.0
        %975 = vmatprep.subr.mxu0 0.0
        %976 = vmatpush1.msra.mxu0 0.0
        %977 = vmatprep.subr.mxu0 0.0
        %978 = vmatpush1.msra.mxu0 0.0
        %979 = vmatprep.subr.mxu0 0.0
        %980 = vmatpush1.msra.mxu0 0.0
        %981 = vmatprep.subr.mxu0 0.0
        %982 = vmatpush1.msra.mxu0 0.0
        %983 = vmatprep.subr.mxu0 0.0
        %984 = vmatpush1.msra.mxu0 0.0
        %985 = vmatprep.subr.mxu0 0.0
        %986 = vmatpush1.msra.mxu0 0.0
        %987 = vmatprep.subr.mxu0 0.0
        %988 = vmatpush1.msra.mxu0 0.0
        %989 = vmatprep.subr.mxu0 0.0
        %990 = vmatpush1.msra.mxu0 0.0
        %991 = vmatprep.subr.mxu0 0.0
        %992 = vmatpush1.msra.mxu0 0.0
        %993 = vmatprep.subr.mxu0 0.0
        %994 = vmatpush1.msra.mxu0 0.0
        %995 = vmatprep.subr.mxu0 0.0
        %996 = vmatpush1.msra.mxu0 0.0
        %997 = vmatprep.subr.mxu0 0.0
        %998 = vmatpush1.msra.mxu0 0.0
        %999 = vmatprep.subr.mxu0 0.0
        %1000 = vmatpush1.msra.mxu0 0.0
        %1001 = vmatprep.subr.mxu0 0.0
        %1002 = vmatpush1.msra.mxu0 0.0
        %1003 = vmatprep.subr.mxu0 0.0
        %1004 = vmatpush1.msra.mxu0 0.0
        %1005 = vmatprep.subr.mxu0 0.0
        %1006 = vmatpush1.msra.mxu0 0.0
        %1007 = vmatprep.subr.mxu0 0.0
        %1008 = vmatpush1.msra.mxu0 0.0
        %1009 = vmatprep.subr.mxu0 0.0
        %1010 = vmatpush1.msra.mxu0 0.0
        %1011 = vmatprep.subr.mxu0 0.0
        %1012 = vmatpush1.msra.mxu0 0.0
        %1013 = vmatprep.subr.mxu0 0.0
        %1014 = vmatpush1.msra.mxu0 0.0
        %1015 = vmatprep.subr.mxu0 0.0
        %1016 = vmatpush1.msra.mxu0 0.0
        %1017 = vmatprep.subr.mxu0 0.0
        %1018 = vmatpush1.msra.mxu0 0.0
        %1019 = vmatprep.subr.mxu0 0.0
        %1020 = vmatpush1.msra.mxu0 0.0
        %1021 = vmatprep.mubr.f32.mxu0 0.0
        %1022 = vmatmul.mubr.f32.gmra.mrb[0].mxu0 %v955
        %v1023 = vpop.f32.mrb[0].mxu0
        %v1024 = vadd.f32 0.0, %v1023
        %v1025 = vpop.f32.mrb[0].mxu0
        %1026 = vdwg.mxu0
        %1027 = vrot.lane.b32.xlu0 %v516, 104
        %v1028 = vpop.permute.xlu0 %1027
        %1029 = vrot.lane.b32.xlu0 %v516, 72
        %v1030 = vpop.permute.xlu0 %1029
        %v1031 = vsel %vm524, %v1028, 0
        %v1033 = vsel %vm524, %v1030, 0
        %1035 = vmatprep.subr.mxu0 0.0
        %1036 = vmatpush1.xpose.msra.mxu0 %v1033
        %1037 = vmatprep.subr.mxu0 0.0
        %1038 = vmatpush1.xpose.msra.mxu0 0.0
        %1039 = vmatprep.subr.mxu0 0.0
        %1040 = vmatpush1.xpose.msra.mxu0 0.0
        %1041 = vmatprep.subr.mxu0 0.0
        %1042 = vmatpush1.xpose.msra.mxu0 0.0
        %1043 = vmatprep.subr.mxu0 0.0
        %1044 = vmatpush1.xpose.msra.mxu0 0.0
        %1045 = vmatprep.subr.mxu0 0.0
        %1046 = vmatpush1.xpose.msra.mxu0 0.0
        %1047 = vmatprep.subr.mxu0 0.0
        %1048 = vmatpush1.xpose.msra.mxu0 0.0
        %1049 = vmatprep.subr.mxu0 0.0
        %1050 = vmatpush1.xpose.msra.mxu0 0.0
        %1051 = vmatprep.subr.mxu0 0.0
        %1052 = vmatpush1.xpose.msra.mxu0 0.0
        %1053 = vmatprep.subr.mxu0 0.0
        %1054 = vmatpush1.xpose.msra.mxu0 0.0
        %1055 = vmatprep.subr.mxu0 0.0
        %1056 = vmatpush1.xpose.msra.mxu0 0.0
        %1057 = vmatprep.subr.mxu0 0.0
        %1058 = vmatpush1.xpose.msra.mxu0 0.0
        %1059 = vmatprep.subr.mxu0 0.0
        %1060 = vmatpush1.xpose.msra.mxu0 0.0
        %1061 = vmatprep.subr.mxu0 0.0
        %1062 = vmatpush1.xpose.msra.mxu0 0.0
        %1063 = vmatprep.subr.mxu0 0.0
        %1064 = vmatpush1.xpose.msra.mxu0 0.0
        %1065 = vmatprep.subr.mxu0 0.0
        %1066 = vmatpush1.xpose.msra.mxu0 0.0
        %1067 = vmatprep.subr.mxu0 0.0
        %1068 = vmatpush1.xpose.msra.mxu0 0.0
        %1069 = vmatprep.subr.mxu0 0.0
        %1070 = vmatpush1.xpose.msra.mxu0 0.0
        %1071 = vmatprep.subr.mxu0 0.0
        %1072 = vmatpush1.xpose.msra.mxu0 0.0
        %1073 = vmatprep.subr.mxu0 0.0
        %1074 = vmatpush1.xpose.msra.mxu0 0.0
        %1075 = vmatprep.subr.mxu0 0.0
        %1076 = vmatpush1.xpose.msra.mxu0 0.0
        %1077 = vmatprep.subr.mxu0 0.0
        %1078 = vmatpush1.xpose.msra.mxu0 0.0
        %1079 = vmatprep.subr.mxu0 0.0
        %1080 = vmatpush1.xpose.msra.mxu0 0.0
        %1081 = vmatprep.subr.mxu0 0.0
        %1082 = vmatpush1.xpose.msra.mxu0 0.0
        %1083 = vmatprep.subr.mxu0 0.0
        %1084 = vmatpush1.xpose.msra.mxu0 0.0
        %1085 = vmatprep.subr.mxu0 0.0
        %1086 = vmatpush1.xpose.msra.mxu0 0.0
        %1087 = vmatprep.subr.mxu0 0.0
        %1088 = vmatpush1.xpose.msra.mxu0 0.0
        %1089 = vmatprep.subr.mxu0 0.0
        %1090 = vmatpush1.xpose.msra.mxu0 0.0
        %1091 = vmatprep.subr.mxu0 0.0
        %1092 = vmatpush1.xpose.msra.mxu0 0.0
        %1093 = vmatprep.subr.mxu0 0.0
        %1094 = vmatpush1.xpose.msra.mxu0 0.0
        %1095 = vmatprep.subr.mxu0 0.0
        %1096 = vmatpush1.xpose.msra.mxu0 0.0
        %1097 = vmatprep.subr.mxu0 0.0
        %1098 = vmatpush1.xpose.msra.mxu0 0.0
        %1099 = vmatprep.mubr.f32.mxu0 0.0
        %1100 = vmatmul.mubr.f32.gmra.mrb[0].mxu0 %v1031
        %v1101 = vpop.f32.mrb[0].mxu0
        %v1102 = vadd.f32 0.0, %v1101
        %v1103 = vpop.f32.mrb[0].mxu0
        %1104 = vdwg.mxu0
        %v1105 = vmul.f32 %v1102, 0.35355338
        %v1106 = vsel %vm520, -1e+09, %v1105
        %v1107 = vsel %vm524, %v1106, -inf
        %1108 = vmax.xlane.f32.xlu0 %v1107
        %v1109 = vpop.xlane.xlu0 %1108
        %v1110 = vsub.f32 %v1106, %v1109
        %v1111 = vmul.f32 %v1110, 1.442695
        %v1112 = vpow.pop %v1111
        %v1113 = vsel %vm524, %v1112, 0.0
        %1114 = vadd.xlane.f32.xlu0 %v1113
        %v1115 = vpop.xlane.xlu0 %1114
        %v1116 = vrcp.pop %v1115
        %v1117 = vmul.f32 %v1112, %v1116
        %s1118 = scalar_lea.vmem %s424, 24 [#allocation11]
        %1119 = vst.msk [vmem:[%s1118] sm:$0xff] %vm524, %v1117
        %1120 = vrot.lane.b32.xlu0 %v516, 40
        %v1121 = vpop.permute.xlu0 %1120
        %v1124 = vsel %vm524, %v1117, 0
        %1126 = vmatprep.subr.mxu0 0.0
        %1127 = vmatpush1.msra.mxu0 %v1121
        %1128 = vmatprep.subr.mxu0 0.0
        %1129 = vmatpush1.msra.mxu0 0.0
        %1130 = vmatprep.subr.mxu0 0.0
        %1131 = vmatpush1.msra.mxu0 0.0
        %1132 = vmatprep.subr.mxu0 0.0
        %1133 = vmatpush1.msra.mxu0 0.0
        %1134 = vmatprep.subr.mxu0 0.0
        %1135 = vmatpush1.msra.mxu0 0.0
        %1136 = vmatprep.subr.mxu0 0.0
        %1137 = vmatpush1.msra.mxu0 0.0
        %1138 = vmatprep.subr.mxu0 0.0
        %1139 = vmatpush1.msra.mxu0 0.0
        %1140 = vmatprep.subr.mxu0 0.0
        %1141 = vmatpush1.msra.mxu0 0.0
        %1142 = vmatprep.subr.mxu0 0.0
        %1143 = vmatpush1.msra.mxu0 0.0
        %1144 = vmatprep.subr.mxu0 0.0
        %1145 = vmatpush1.msra.mxu0 0.0
        %1146 = vmatprep.subr.mxu0 0.0
        %1147 = vmatpush1.msra.mxu0 0.0
        %1148 = vmatprep.subr.mxu0 0.0
        %1149 = vmatpush1.msra.mxu0 0.0
        %1150 = vmatprep.subr.mxu0 0.0
        %1151 = vmatpush1.msra.mxu0 0.0
        %1152 = vmatprep.subr.mxu0 0.0
        %1153 = vmatpush1.msra.mxu0 0.0
        %1154 = vmatprep.subr.mxu0 0.0
        %1155 = vmatpush1.msra.mxu0 0.0
        %1156 = vmatprep.subr.mxu0 0.0
        %1157 = vmatpush1.msra.mxu0 0.0
        %1158 = vmatprep.subr.mxu0 0.0
        %1159 = vmatpush1.msra.mxu0 0.0
        %1160 = vmatprep.subr.mxu0 0.0
        %1161 = vmatpush1.msra.mxu0 0.0
        %1162 = vmatprep.subr.mxu0 0.0
        %1163 = vmatpush1.msra.mxu0 0.0
        %1164 = vmatprep.subr.mxu0 0.0
        %1165 = vmatpush1.msra.mxu0 0.0
        %1166 = vmatprep.subr.mxu0 0.0
        %1167 = vmatpush1.msra.mxu0 0.0
        %1168 = vmatprep.subr.mxu0 0.0
        %1169 = vmatpush1.msra.mxu0 0.0
        %1170 = vmatprep.subr.mxu0 0.0
        %1171 = vmatpush1.msra.mxu0 0.0
        %1172 = vmatprep.subr.mxu0 0.0
        %1173 = vmatpush1.msra.mxu0 0.0
        %1174 = vmatprep.subr.mxu0 0.0
        %1175 = vmatpush1.msra.mxu0 0.0
        %1176 = vmatprep.subr.mxu0 0.0
        %1177 = vmatpush1.msra.mxu0 0.0
        %1178 = vmatprep.subr.mxu0 0.0
        %1179 = vmatpush1.msra.mxu0 0.0
        %1180 = vmatprep.subr.mxu0 0.0
        %1181 = vmatpush1.msra.mxu0 0.0
        %1182 = vmatprep.subr.mxu0 0.0
        %1183 = vmatpush1.msra.mxu0 0.0
        %1184 = vmatprep.subr.mxu0 0.0
        %1185 = vmatpush1.msra.mxu0 0.0
        %1186 = vmatprep.subr.mxu0 0.0
        %1187 = vmatpush1.msra.mxu0 0.0
        %1188 = vmatprep.subr.mxu0 0.0
        %1189 = vmatpush1.msra.mxu0 0.0
        %1190 = vmatprep.mubr.f32.mxu0 0.0
        %1191 = vmatmul.mubr.f32.gmra.mrb[0].mxu0 %v1124
        %v1192 = vpop.f32.mrb[0].mxu0
        %v1193 = vadd.f32 0.0, %v1192
        %v1194 = vpop.f32.mrb[0].mxu0
        %1195 = vdwg.mxu0
        %1197 = vrot.lane.b32.xlu0 %v855, 8
        %v1198 = vpop.permute.xlu0 %1197
        %1201 = vrot.lane.b32.xlu0 %v1024, 16
        %v1202 = vpop.permute.xlu0 %1201
        %1205 = vrot.lane.b32.xlu0 %v1193, 24
        %v1206 = vpop.permute.xlu0 %1205
        %v1208 = vsel %vm524, %v686, %v1198
        %vm1209 = vcmask 130048
        %v1210 = vsel %vm1209, %v1208, %v1202
        %vm1211 = vcmask 195584
        %v1212 = vsel %vm1211, %v1210, %v1206
        %v1213 = vld [vmem:[#allocation8] sm:$0xff]
        %v1214 = vld [vmem:[#allocation8 + $0x8] sm:$0xff]
        %v1215 = vld [vmem:[#allocation8 + $0x10] sm:$0xff]
        %v1216 = vld [vmem:[#allocation8 + $0x18] sm:$0xff]
        %v1217 = vld [vmem:[%s5] sm:$0x1]
        %v1219 = vlaneseq
        %v1220 = vshrl.u32 %v1219, 7
        %v1221 = vsub.s32 0, %v1220
        %v1222 = vrot.slane %v1217, %v1221
        %vm1224 = vcmask 261120
        %v1226 = vsel %vm1224, %v1212, 0
        %1228 = vmatprep.subr.mxu0 0.0
        %1229 = vmatpush1.msra.mxu0 %v1213
        %1230 = vmatprep.subr.mxu0 0.0
        %1231 = vmatpush1.msra.mxu0 %v1214
        %1232 = vmatprep.subr.mxu0 0.0
        %1233 = vmatpush1.msra.mxu0 %v1215
        %1234 = vmatprep.subr.mxu0 0.0
        %1235 = vmatpush1.msra.mxu0 %v1216
        %1236 = vmatprep.subr.mxu0 0.0
        %1237 = vmatpush1.msra.mxu0 0.0
        %1238 = vmatprep.subr.mxu0 0.0
        %1239 = vmatpush1.msra.mxu0 0.0
        %1240 = vmatprep.subr.mxu0 0.0
        %1241 = vmatpush1.msra.mxu0 0.0
        %1242 = vmatprep.subr.mxu0 0.0
        %1243 = vmatpush1.msra.mxu0 0.0
        %1244 = vmatprep.subr.mxu0 0.0
        %1245 = vmatpush1.msra.mxu0 0.0
        %1246 = vmatprep.subr.mxu0 0.0
        %1247 = vmatpush1.msra.mxu0 0.0
        %1248 = vmatprep.subr.mxu0 0.0
        %1249 = vmatpush1.msra.mxu0 0.0
        %1250 = vmatprep.subr.mxu0 0.0
        %1251 = vmatpush1.msra.mxu0 0.0
        %1252 = vmatprep.subr.mxu0 0.0
        %1253 = vmatpush1.msra.mxu0 0.0
        %1254 = vmatprep.subr.mxu0 0.0
        %1255 = vmatpush1.msra.mxu0 0.0
        %1256 = vmatprep.subr.mxu0 0.0
        %1257 = vmatpush1.msra.mxu0 0.0
        %1258 = vmatprep.subr.mxu0 0.0
        %1259 = vmatpush1.msra.mxu0 0.0
        %1260 = vmatprep.subr.mxu0 0.0
        %1261 = vmatpush1.msra.mxu0 0.0
        %1262 = vmatprep.subr.mxu0 0.0
        %1263 = vmatpush1.msra.mxu0 0.0
        %1264 = vmatprep.subr.mxu0 0.0
        %1265 = vmatpush1.msra.mxu0 0.0
        %1266 = vmatprep.subr.mxu0 0.0
        %1267 = vmatpush1.msra.mxu0 0.0
        %1268 = vmatprep.subr.mxu0 0.0
        %1269 = vmatpush1.msra.mxu0 0.0
        %1270 = vmatprep.subr.mxu0 0.0
        %1271 = vmatpush1.msra.mxu0 0.0
        %1272 = vmatprep.subr.mxu0 0.0
        %1273 = vmatpush1.msra.mxu0 0.0
        %1274 = vmatprep.subr.mxu0 0.0
        %1275 = vmatpush1.msra.mxu0 0.0
        %1276 = vmatprep.subr.mxu0 0.0
        %1277 = vmatpush1.msra.mxu0 0.0
        %1278 = vmatprep.subr.mxu0 0.0
        %1279 = vmatpush1.msra.mxu0 0.0
        %1280 = vmatprep.subr.mxu0 0.0
        %1281 = vmatpush1.msra.mxu0 0.0
        %1282 = vmatprep.subr.mxu0 0.0
        %1283 = vmatpush1.msra.mxu0 0.0
        %1284 = vmatprep.subr.mxu0 0.0
        %1285 = vmatpush1.msra.mxu0 0.0
        %1286 = vmatprep.subr.mxu0 0.0
        %1287 = vmatpush1.msra.mxu0 0.0
        %1288 = vmatprep.subr.mxu0 0.0
        %1289 = vmatpush1.msra.mxu0 0.0
        %1290 = vmatprep.subr.mxu0 0.0
        %1291 = vmatpush1.msra.mxu0 0.0
        %1292 = vmatprep.mubr.f32.mxu0 0.0
        %1293 = vmatmul.mubr.f32.gmra.mrb[0].mxu0 %v1226
        %v1294 = vpop.f32.mrb[0].mxu0
        %v1295 = vadd.f32 %v1222, %v1294
        %v1296 = vpop.f32.mrb[0].mxu0
        %1297 = vdwg.mxu0
        %v1298 = vadd.f32 %v1295, %v425
        %v1299 = vsel %vm1224, %v1298, 0.0
        %1300 = vadd.xlane.f32.xlu0 %v1299
        %v1301 = vpop.xlane.xlu0 %1300
        %v1302 = vrcp.pop 32.0
        %v1303 = vmul.f32 %v1301, %v1302
        %v1304 = vsub.f32 %v1298, %v1303
        %v1305 = vmul.f32 %v1304, %v1304
        %v1306 = vsel %vm1224, %v1305, 0.0
        %1307 = vadd.xlane.f32.xlu0 %v1306
        %v1308 = vpop.xlane.xlu0 %1307
        %v1309 = vmul.f32 %v1308, %v1302
        %v1310 = vadd.f32 %v1309, 1e-05
        %v1311 = vrsqrt.pop %v1310
        %v1312 = vmul.f32 %v1304, %v1311
        %v1313 = vld [vmem:[%s6] sm:$0x1]
        %v1315 = vlaneseq
        %v1316 = vshrl.u32 %v1315, 7
        %v1317 = vsub.s32 0, %v1316
        %v1318 = vrot.slane %v1313, %v1317
        %v1320 = vmul.f32 %v1312, %v1318
        %v1321 = vld [vmem:[%s7] sm:$0x1]
        %v1323 = vlaneseq
        %v1324 = vshrl.u32 %v1323, 7
        %v1325 = vsub.s32 0, %v1324
        %v1326 = vrot.slane %v1321, %v1325
        %v1328 = vadd.f32 %v1320, %v1326
        %1329 = vst.msk [vmem:[%s417] sm:$0xff] %vm1224, %v1328
        %s1330 = sand.u32 %s220, 1
        %s1331 = scalar_lea.sflag [#allocation4], %s1330
        %s1332 = sand.u32 %s220, 1
        %s1333 = smul.addr %s1332, 8
        %s1334 = scalar_lea.vmem [#allocation10], %s1333
        %s1335 = sand.u32 %s246, 1
        %s1336 = scalar_lea.sflag [#allocation12], %s1335
        %s1337 = sand.u32 %s246, 1
        %s1338 = smul.addr %s1337, 32
        %s1339 = scalar_lea.vmem [#allocation11], %s1338
        // Predicated region
        $region69: #{tpu_custom_call.1} parent=51 // pred_check
          %p1340 = pneg %p230
        $region70: #{tpu_custom_call.1} parent=51 // pred_check_branch
          %1342 = sbr.rel (%p1340) target = $region72
        $region71: #{tpu_custom_call.1} parent=51 // pred_region
          %s1344 = ssub.s32 128, 128
          %1345 = vsyncadd %s1331, %s1344
          %s1346 = smul.addr %s34, 128
          %s1347 = scalar_lea.hbm %s8, %s1346
          %s1349 = sshll.u32 %s1334, 4
          %s1350 = int_to_ptr.vmem [resolvable:$true] %s1349
          %1352 = dma.vmem_to_hbm [thread:$0]  %s1350, 128, %s1347, %s1331
        $region72: #{tpu_custom_call.1} parent=51 // pred_fallthru
          _
        // Predicated region
        $region73: #{tpu_custom_call.1} parent=51 // pred_check
          %p1353 = pneg %p256
        $region74: #{tpu_custom_call.1} parent=51 // pred_check_branch
          %1355 = sbr.rel (%p1353) target = $region76
        $region75: #{tpu_custom_call.1} parent=51 // pred_region
          %s1357 = ssub.s32 512, 512
          %1358 = vsyncadd %s1336, %s1357
          %s1359 = smul.addr %s34, 4
          %s1360 = smul.addr %s1359, 128
          %s1361 = scalar_lea.hbm %s9, %s1360
          %s1362 = sshll.u32 %s1339, 4
          %s1363 = int_to_ptr.vmem [resolvable:$true] %s1362
          %1368 = dma.vmem_to_hbm [thread:$0]  %s1363, 512, %s1361, %s1336, 128, 128, 8
        $region76: #{tpu_custom_call.1} parent=51 // pred_fallthru
          _
      $region52: #{tpu_custom_call.1} parent=5 // pred_fallthru
        _
      %p1369 = scmp.le.s32.totalorder 2, %s29
      // Predicated region
      $region77: #{tpu_custom_call.1} parent=5 // pred_check
        %p1370 = pneg %p1369
      $region78: #{tpu_custom_call.1} parent=5 // pred_check_branch
        %1372 = sbr.rel (%p1370) target = $region80
      $region79: #{tpu_custom_call.1} parent=5 // pred_region
        %s1373 = ssub.s32 %s29, 2
        // Predicated region
        $region81: #{tpu_custom_call.1} parent=79 // pred_check
          %p1374 = pneg %p236
        $region82: #{tpu_custom_call.1} parent=79 // pred_check_branch
          %1376 = sbr.rel (%p1374) target = $region84
        $region83: #{tpu_custom_call.1} parent=79 // pred_region
          %s1377 = sand.u32 %s221, 1
          %s1378 = scalar_lea.sflag [#allocation4], %s1377
          %s1379 = sand.u32 %s221, 1
          %s1380 = smul.addr %s1379, 8
          %s1381 = scalar_lea.vmem [#allocation10], %s1380
          %1382 = dma.done %s1378, 128
        $region84: #{tpu_custom_call.1} parent=79 // pred_fallthru
          _
        // Predicated region
        $region85: #{tpu_custom_call.1} parent=79 // pred_check
          %p1383 = pneg %p262
        $region86: #{tpu_custom_call.1} parent=79 // pred_check_branch
          %1385 = sbr.rel (%p1383) target = $region88
        $region87: #{tpu_custom_call.1} parent=79 // pred_region
          %s1386 = sand.u32 %s247, 1
          %s1387 = scalar_lea.sflag [#allocation12], %s1386
          %s1388 = sand.u32 %s247, 1
          %s1389 = smul.addr %s1388, 32
          %s1390 = scalar_lea.vmem [#allocation11], %s1389
          %1391 = dma.done %s1387, 512
        $region88: #{tpu_custom_call.1} parent=79 // pred_fallthru
          _
      $region80: #{tpu_custom_call.1} parent=5 // pred_fallthru
        _
    $region6: #{tpu_custom_call.1} parent=1 // loop_footer
      %s33 = sadd.s32 1, %s29
    $region7: #{tpu_custom_call.1} parent=1 // loop_footer_branch
      %28 = sbr.rel target = $region3
    $region8: #{tpu_custom_call.1} parent=1 // loop_exit
      _
    %1392 = vsyncpa [#allocation3], 1
    %s1393 = scalar_lea.sflag [#allocation3], 1
    %1394 = vsyncpa %s1393, 1
    %1395 = vsyncpa [#allocation6], 1
    %s1396 = scalar_lea.sflag [#allocation6], 1
    %1397 = vsyncpa %s1396, 1
    %1398 = vsyncpa [#allocation9], 1
    %1399 = vsyncpa [#allocation4], 1
    %s1400 = scalar_lea.sflag [#allocation4], 1
    %1401 = vsyncpa %s1400, 1
    %1402 = vsyncpa [#allocation12], 1
    %s1403 = scalar_lea.sflag [#allocation12], 1
    %1404 = vsyncpa %s1403, 1

</llo_original>
